<compile_context>
chip_gen: v7x
topology: tpu7x:2x2x1
jax: 0.10.0
libtpu: 0.0.40
codegen_flags: <defaults>
</compile_context>

<pallas_src>
import functools

import jax
import jax.numpy as jnp
from jax.experimental import pallas as pl
from jax.experimental.pallas import tpu as pltpu


# ---------------------------------------------------------------------------
# Fused whole-network kernel: grid axis = layer index (sequential).
# ---------------------------------------------------------------------------
def fused_rgat_net_kernel(x_ref, w0_ref, w1_ref, q_ref, k_ref, gatb_ref,
                          w1a_ref, w1b_ref, b1_ref, gamma_ref, beta_ref,
                          w2_ref, b2_ref, out_ref, x_state, *,
                          n0, num_heads, negative_slope=0.2, eps=1e-5):
    layer = pl.program_id(0)

    # Load node features once; they stay resident in VMEM across all layers.
    @pl.when(layer == 0)
    def _():
        x_state[...] = x_ref[...]

    B, N, D = x_state.shape
    n1 = N - n0
    inv_heads = 1.0 / float(num_heads)

    x = x_state[...]                                   # (B, N, D) f32
    x2 = x.reshape(B * N, D)
    xb = x2.astype(jnp.bfloat16)

    # ---- relational projections, batched over all B*N rows and heads ----
    z0 = jnp.dot(xb, w0_ref[...], preferred_element_type=jnp.float32)  # (B*N, H*D)
    z1 = jnp.dot(xb, w1_ref[...], preferred_element_type=jnp.float32)
    z0b = z0.astype(jnp.bfloat16)
    z1b = z1.astype(jnp.bfloat16)
    q0 = jnp.dot(z0b, q_ref[...], preferred_element_type=jnp.float32)  # (B*N, H)
    q1 = jnp.dot(z1b, q_ref[...], preferred_element_type=jnp.float32)
    k0t = jnp.dot(z0b, k_ref[...], preferred_element_type=jnp.float32).T  # (H, B*N)
    k1t = jnp.dot(z1b, k_ref[...], preferred_element_type=jnp.float32).T

    def leaky(v):
        return jnp.where(v >= 0, v, negative_slope * v)

    diag0 = (jax.lax.broadcasted_iota(jnp.int32, (n0, n0), 0)
             == jax.lax.broadcasted_iota(jnp.int32, (n0, n0), 1))
    diag1 = (jax.lax.broadcasted_iota(jnp.int32, (n1, n1), 0)
             == jax.lax.broadcasted_iota(jnp.int32, (n1, n1), 1))

    # ---- block-structured relational attention (no (N,N) relation selects) --
    msg_rows = []
    for b in range(B):                                   # static batch loop
        r0, r1 = b * N, (b + 1) * N
        z0_b, z1_b = z0[r0:r1], z1[r0:r1]                # (N, H*D) f32
        q0_b, q1_b = q0[r0:r1], q1[r0:r1]                # (N, H)
        k0_b, k1_b = k0t[:, r0:r1], k1t[:, r0:r1]        # (H, N)

        acc0 = jnp.zeros((n0, D), jnp.float32)
        acc1 = jnp.zeros((n1, D), jnp.float32)
        for h in range(num_heads):                       # static head loop
            zh0 = z0_b[:, h * D:(h + 1) * D].astype(jnp.bfloat16)   # (N, D)
            zh1 = z1_b[:, h * D:(h + 1) * D].astype(jnp.bfloat16)

            # targets in block 0: sources block0 = relation 0, block1 = rel 1
            a00 = leaky(q0_b[:n0, h:h + 1] + k0_b[h:h + 1, :n0])     # (n0, n0)
            a01 = leaky(q1_b[:n0, h:h + 1] + k1_b[h:h + 1, n0:])     # (n0, n1)
            a00 = jnp.where(diag0, -1e30, a00)                       # no self-loops
            m = jnp.maximum(jnp.max(a00, axis=1, keepdims=True),
                            jnp.max(a01, axis=1, keepdims=True))
            p00 = jnp.exp(a00 - m)
            p01 = jnp.exp(a01 - m)
            inv = pl.reciprocal(jnp.sum(p00, axis=1, keepdims=True)
                                + jnp.sum(p01, axis=1, keepdims=True),
                                approx=True)
            msg0 = (jnp.dot(p00.astype(jnp.bfloat16), zh0[:n0],
                            preferred_element_type=jnp.float32)
                    + jnp.dot(p01.astype(jnp.bfloat16), zh1[n0:],
                              preferred_element_type=jnp.float32))
            acc0 = acc0 + msg0 * inv

            # targets in block 1: sources block0 = relation 1, block1 = rel 0
            a10 = leaky(q1_b[n0:, h:h + 1] + k1_b[h:h + 1, :n0])     # (n1, n0)
            a11 = leaky(q0_b[n0:, h:h + 1] + k0_b[h:h + 1, n0:])     # (n1, n1)
            a11 = jnp.where(diag1, -1e30, a11)
            m = jnp.maximum(jnp.max(a10, axis=1, keepdims=True),
                            jnp.max(a11, axis=1, keepdims=True))
            p10 = jnp.exp(a10 - m)
            p11 = jnp.exp(a11 - m)
            inv = pl.reciprocal(jnp.sum(p10, axis=1, keepdims=True)
                                + jnp.sum(p11, axis=1, keepdims=True),
                                approx=True)
            msg1 = (jnp.dot(p10.astype(jnp.bfloat16), zh1[:n0],
                            preferred_element_type=jnp.float32)
                    + jnp.dot(p11.astype(jnp.bfloat16), zh0[n0:],
                              preferred_element_type=jnp.float32))
            acc1 = acc1 + msg1 * inv

        msg_rows.append(acc0)
        msg_rows.append(acc1)

    # concat=False -> mean over heads, then RGAT bias.     (B*N, D) f32
    msg = jnp.concatenate(msg_rows, axis=0) * inv_heads + gatb_ref[...]

    # ---- MLP([2D, 2D, D]) on concat([x, msg]) + BatchNorm + ReLU + residual --
    msgb = msg.astype(jnp.bfloat16)
    hid = (jnp.dot(xb, w1a_ref[...], preferred_element_type=jnp.float32)
           + jnp.dot(msgb, w1b_ref[...], preferred_element_type=jnp.float32)
           + b1_ref[...])                                            # (B*N, 2D)
    mu = jnp.mean(hid, axis=0, keepdims=True)
    var = jnp.mean((hid - mu) ** 2, axis=0, keepdims=True)           # biased var
    hid = (hid - mu) * jax.lax.rsqrt(var + eps) * gamma_ref[...] + beta_ref[...]
    hid = jnp.maximum(hid, 0.0)                                      # ReLU
    y = jnp.dot(hid.astype(jnp.bfloat16), w2_ref[...],
                preferred_element_type=jnp.float32) + b2_ref[...]    # (B*N, D)

    x_state[...] = (x2 + y).reshape(B, N, D)                         # residual

    @pl.when(layer == pl.num_programs(0) - 1)
    def _():
        out_ref[...] = x_state[...]


# ---------------------------------------------------------------------------
# Wrapper replicating myRGAT.forward
# ---------------------------------------------------------------------------
def rgat_forward(desc0, desc1, params, num_heads):
    B, D, N0 = desc0.shape
    N1 = desc1.shape[2]
    N = N0 + N1
    L = len(params)
    HD = num_heads * D

    x = jnp.concatenate([desc0, desc1], axis=2)            # (B, D, N)
    x = jnp.transpose(x, (0, 2, 1)).astype(jnp.float32)    # (B, N, D)

    def stack(name, dtype):
        return jnp.stack([p[name] for p in params]).astype(dtype)

    # bf16 for matmul weights, f32 for biases / BN affine.
    w0 = stack("w_rel0", jnp.bfloat16)       # (L, D, H*D)
    w1 = stack("w_rel1", jnp.bfloat16)       # (L, D, H*D)
    q = stack("att_q", jnp.bfloat16)         # (L, H*D, H)
    k = stack("att_k", jnp.bfloat16)         # (L, H*D, H)
    gatb = stack("gat_bias", jnp.float32)    # (L, 1, D)
    w1a = stack("w1a", jnp.bfloat16)         # (L, D, 2D)
    w1b = stack("w1b", jnp.bfloat16)         # (L, D, 2D)
    b1 = stack("b1", jnp.float32)            # (L, 1, 2D)
    gamma = stack("gamma", jnp.float32)      # (L, 1, 2D)
    beta = stack("beta", jnp.float32)        # (L, 1, 2D)
    w2 = stack("w2t", jnp.bfloat16)          # (L, 2D, D)
    b2 = stack("b2", jnp.float32)            # (L, 1, D)

    kern = functools.partial(fused_rgat_net_kernel, n0=N0, num_heads=num_heads)

    def per_layer(shape):
        nd = len(shape)
        return pl.BlockSpec((None,) + shape, lambda l, nd=nd: (l,) + (0,) * nd)

    def resident(shape):
        nd = len(shape)
        return pl.BlockSpec(shape, lambda l, nd=nd: (0,) * nd)

    out = pl.pallas_call(
        kern,
        out_shape=jax.ShapeDtypeStruct((B, N, D), jnp.float32),
        grid=(L,),
        in_specs=[
            resident((B, N, D)),                          # x (resident)
            per_layer((D, HD)), per_layer((D, HD)),       # W_rel0, W_rel1
            per_layer((HD, num_heads)),                   # Q
            per_layer((HD, num_heads)),                   # K
            per_layer((1, D)),                            # RGAT bias
            per_layer((D, 2 * D)), per_layer((D, 2 * D)), # conv1 (x / msg halves)
            per_layer((1, 2 * D)),                        # conv1 bias
            per_layer((1, 2 * D)), per_layer((1, 2 * D)), # BN gamma / beta
            per_layer((2 * D, D)), per_layer((1, D)),     # conv2 weight / bias
        ],
        out_specs=resident((B, N, D)),
        scratch_shapes=[pltpu.VMEM((B, N, D), jnp.float32)],
        compiler_params=pltpu.CompilerParams(
            dimension_semantics=("arbitrary",)),
    )(x, w0, w1, q, k, gatb, w1a, w1b, b1, gamma, beta, w2, b2)

    xT = jnp.transpose(out, (0, 2, 1))                     # (B, D, N)
    return xT[:, :, :N0], xT[:, :, N0:]


def init_layer_params(key, D, H):
    ks = jax.random.split(key, 8)
    s = 0.1
    W = jax.random.normal(ks[0], (2, D, H * D), jnp.float32) * s       # per-relation weight
    Q = jax.random.normal(ks[1], (H * D, H), jnp.float32) * s          # attention query
    K = jax.random.normal(ks[2], (H * D, H), jnp.float32) * s          # attention key
    gat_b = jax.random.normal(ks[3], (1, D), jnp.float32) * s          # RGAT bias
    conv1_w = jax.random.normal(ks[4], (2 * D, 2 * D), jnp.float32) * s  # Conv1d(2D,2D,1)
    conv1_b = jax.random.normal(ks[5], (1, 2 * D), jnp.float32) * s
    conv2_w = jax.random.normal(ks[6], (D, 2 * D), jnp.float32) * s      # Conv1d(2D,D,1)
    conv2_b = jax.random.normal(ks[7], (1, D), jnp.float32) * s
    return {
        "w_rel0": W[0], "w_rel1": W[1], "att_q": Q, "att_k": K, "gat_bias": gat_b,
        "w1a": jnp.transpose(conv1_w[:, :D]),   # (D, 2D) acts on the x half
        "w1b": jnp.transpose(conv1_w[:, D:]),   # (D, 2D) acts on the msg half
        "b1": conv1_b,
        "gamma": jnp.ones((1, 2 * D), jnp.float32),   # BatchNorm1d affine init
        "beta": jnp.zeros((1, 2 * D), jnp.float32),
        "w2t": jnp.transpose(conv2_w),          # (2D, D)
        "b2": conv2_b,
    }


if __name__ == "__main__":
    B, D, N0, N1 = 2, 32, 8, 8          # batch, feature_dim, nodes per image
    num_heads = 1
    layer_names = ["self", "cross"]

    key = jax.random.PRNGKey(0)
    k_in, k_par = jax.random.split(key)
    kd0, kd1 = jax.random.split(k_in)
    desc0 = jax.random.normal(kd0, (B, D, N0), jnp.float32)
    desc1 = jax.random.normal(kd1, (B, D, N1), jnp.float32)

    layer_keys = jax.random.split(k_par, len(layer_names))
    params = [init_layer_params(k, D, num_heads) for k in layer_keys]

    fwd = jax.jit(rgat_forward, static_argnums=(3,))
    out0, out1 = fwd(desc0, desc1, params, num_heads)
    out0 = jax.block_until_ready(out0)
    out1 = jax.block_until_ready(out1)

    assert out0.shape == (B, D, N0), out0.shape
    assert out1.shape == (B, D, N1), out1.shape
    assert bool(jnp.all(jnp.isfinite(out0))) and bool(jnp.all(jnp.isfinite(out1)))
    print("KERNEL_OK")
</pallas_src>

<mosaic_0001>
module attributes {stable_mosaic.version = 11 : i64} {
  func.func @fused_rgat_net_kernel(%arg0: i32, %arg1: memref<2x16x32xf32, #tpu.memory_space<vmem>>, %arg2: memref<1x32x32xbf16, #tpu.memory_space<vmem>>, %arg3: memref<1x32x32xbf16, #tpu.memory_space<vmem>>, %arg4: memref<1x32x1xbf16, #tpu.memory_space<vmem>>, %arg5: memref<1x32x1xbf16, #tpu.memory_space<vmem>>, %arg6: memref<1x1x32xf32, #tpu.memory_space<vmem>>, %arg7: memref<1x32x64xbf16, #tpu.memory_space<vmem>>, %arg8: memref<1x32x64xbf16, #tpu.memory_space<vmem>>, %arg9: memref<1x1x64xf32, #tpu.memory_space<vmem>>, %arg10: memref<1x1x64xf32, #tpu.memory_space<vmem>>, %arg11: memref<1x1x64xf32, #tpu.memory_space<vmem>>, %arg12: memref<1x64x32xbf16, #tpu.memory_space<vmem>>, %arg13: memref<1x1x32xf32, #tpu.memory_space<vmem>>, %arg14: memref<2x16x32xf32, #tpu.memory_space<vmem>>, %arg15: memref<2x16x32xf32, #tpu.memory_space<vmem>>) attributes {dimension_semantics = [#tpu.dimension_semantics<arbitrary>], iteration_bounds = array<i64: 2>, scalar_prefetch = 0 : i64, scratch_operands = 1 : i64, tpu.core_type = #tpu.core_type<tc>, window_params = [{pipeline_mode = #tpu.pipeline_mode<synchronous>, transform_indices = @transform_0, window_bounds = array<i64: 2, 16, 32>}, {transform_indices = @transform_1, window_bounds = array<i64: 1, 32, 32>}, {transform_indices = @transform_2, window_bounds = array<i64: 1, 32, 32>}, {transform_indices = @transform_3, window_bounds = array<i64: 1, 32, 1>}, {transform_indices = @transform_4, window_bounds = array<i64: 1, 32, 1>}, {transform_indices = @transform_5, window_bounds = array<i64: 1, 1, 32>}, {transform_indices = @transform_6, window_bounds = array<i64: 1, 32, 64>}, {transform_indices = @transform_7, window_bounds = array<i64: 1, 32, 64>}, {transform_indices = @transform_8, window_bounds = array<i64: 1, 1, 64>}, {transform_indices = @transform_9, window_bounds = array<i64: 1, 1, 64>}, {transform_indices = @transform_10, window_bounds = array<i64: 1, 1, 64>}, {transform_indices = @transform_11, window_bounds = array<i64: 1, 64, 32>}, {transform_indices = @transform_12, window_bounds = array<i64: 1, 1, 32>}, {pipeline_mode = #tpu.pipeline_mode<synchronous>, transform_indices = @transform_13, window_bounds = array<i64: 2, 16, 32>}]} {
    %c0_i32 = arith.constant 0 : i32
    %0 = arith.cmpi eq, %arg0, %c0_i32 : i32
    %1 = arith.extui %0 : i1 to i32
    %c0_i32_0 = arith.constant 0 : i32
    %2 = arith.cmpi ne, %1, %c0_i32_0 : i32
    scf.if %2 {
      %c0_112 = arith.constant 0 : index
      %c0_113 = arith.constant 0 : index
      %c0_114 = arith.constant 0 : index
      %311 = vector.load %arg1[%c0_112, %c0_113, %c0_114] : memref<2x16x32xf32, #tpu.memory_space<vmem>>, vector<2x16x32xf32>
      %c0_115 = arith.constant 0 : index
      %c0_116 = arith.constant 0 : index
      %c0_117 = arith.constant 0 : index
      %312 = vector.load %arg15[%c0_115, %c0_116, %c0_117] : memref<2x16x32xf32, #tpu.memory_space<vmem>>, vector<2x16x32xf32>
      tpu.vector_store %arg15[%c0_115, %c0_116, %c0_117], %311 {strides = array<i32>} : memref<2x16x32xf32, #tpu.memory_space<vmem>>, vector<2x16x32xf32>,
    } else {
    }
    %c0 = arith.constant 0 : index
    %c0_1 = arith.constant 0 : index
    %c0_2 = arith.constant 0 : index
    %3 = vector.load %arg15[%c0, %c0_1, %c0_2] : memref<2x16x32xf32, #tpu.memory_space<vmem>>, vector<2x16x32xf32>
    %4 = vector.shape_cast %3 : vector<2x16x32xf32> to vector<32x32xf32>
    %5 = arith.truncf %4 : vector<32x32xf32> to vector<32x32xbf16>
    %c0_3 = arith.constant 0 : index
    %c0_4 = arith.constant 0 : index
    %c0_5 = arith.constant 0 : index
    %6 = vector.load %arg2[%c0_3, %c0_4, %c0_5] : memref<1x32x32xbf16, #tpu.memory_space<vmem>>, vector<1x32x32xbf16>
    %7 = vector.shape_cast %6 : vector<1x32x32xbf16> to vector<32x32xbf16>
    %cst = arith.constant dense<0.000000e+00> : vector<32x32xf32>
    %8 = tpu.matmul %5, %7, %cst {dimension_numbers = #tpu.dot_dimension_numbers<[1], [0], [0], [1], [0, 0, 1, 1], [], []>} : vector<32x32xbf16>, vector<32x32xbf16>, vector<32x32xf32> -> vector<32x32xf32>
    %c0_6 = arith.constant 0 : index
    %c0_7 = arith.constant 0 : index
    %c0_8 = arith.constant 0 : index
    %9 = vector.load %arg3[%c0_6, %c0_7, %c0_8] : memref<1x32x32xbf16, #tpu.memory_space<vmem>>, vector<1x32x32xbf16>
    %10 = vector.shape_cast %9 : vector<1x32x32xbf16> to vector<32x32xbf16>
    %cst_9 = arith.constant dense<0.000000e+00> : vector<32x32xf32>
    %11 = tpu.matmul %5, %10, %cst_9 {dimension_numbers = #tpu.dot_dimension_numbers<[1], [0], [0], [1], [0, 0, 1, 1], [], []>} : vector<32x32xbf16>, vector<32x32xbf16>, vector<32x32xf32> -> vector<32x32xf32>
    %12 = arith.truncf %8 : vector<32x32xf32> to vector<32x32xbf16>
    %13 = arith.truncf %11 : vector<32x32xf32> to vector<32x32xbf16>
    %c0_10 = arith.constant 0 : index
    %c0_11 = arith.constant 0 : index
    %c0_12 = arith.constant 0 : index
    %14 = vector.load %arg4[%c0_10, %c0_11, %c0_12] : memref<1x32x1xbf16, #tpu.memory_space<vmem>>, vector<1x32x1xbf16>
    %15 = vector.shape_cast %14 : vector<1x32x1xbf16> to vector<32x1xbf16>
    %cst_13 = arith.constant dense<0.000000e+00> : vector<32x1xf32>
    %16 = tpu.matmul %12, %15, %cst_13 {dimension_numbers = #tpu.dot_dimension_numbers<[1], [0], [0], [1], [0, 0, 1, 1], [], []>} : vector<32x32xbf16>, vector<32x1xbf16>, vector<32x1xf32> -> vector<32x1xf32>
    %c0_14 = arith.constant 0 : index
    %c0_15 = arith.constant 0 : index
    %c0_16 = arith.constant 0 : index
    %17 = vector.load %arg4[%c0_14, %c0_15, %c0_16] : memref<1x32x1xbf16, #tpu.memory_space<vmem>>, vector<1x32x1xbf16>
    %18 = vector.shape_cast %17 : vector<1x32x1xbf16> to vector<32x1xbf16>
    %cst_17 = arith.constant dense<0.000000e+00> : vector<32x1xf32>
    %19 = tpu.matmul %13, %18, %cst_17 {dimension_numbers = #tpu.dot_dimension_numbers<[1], [0], [0], [1], [0, 0, 1, 1], [], []>} : vector<32x32xbf16>, vector<32x1xbf16>, vector<32x1xf32> -> vector<32x1xf32>
    %c0_18 = arith.constant 0 : index
    %c0_19 = arith.constant 0 : index
    %c0_20 = arith.constant 0 : index
    %20 = vector.load %arg5[%c0_18, %c0_19, %c0_20] : memref<1x32x1xbf16, #tpu.memory_space<vmem>>, vector<1x32x1xbf16>
    %21 = vector.shape_cast %20 : vector<1x32x1xbf16> to vector<32x1xbf16>
    %cst_21 = arith.constant dense<0.000000e+00> : vector<32x1xf32>
    %22 = tpu.matmul %12, %21, %cst_21 {dimension_numbers = #tpu.dot_dimension_numbers<[1], [0], [0], [1], [0, 0, 1, 1], [], []>} : vector<32x32xbf16>, vector<32x1xbf16>, vector<32x1xf32> -> vector<32x1xf32>
    %23 = tpu.transpose %22, [1, 0] : vector<32x1xf32> -> vector<1x32xf32>
    %c0_22 = arith.constant 0 : index
    %c0_23 = arith.constant 0 : index
    %c0_24 = arith.constant 0 : index
    %24 = vector.load %arg5[%c0_22, %c0_23, %c0_24] : memref<1x32x1xbf16, #tpu.memory_space<vmem>>, vector<1x32x1xbf16>
    %25 = vector.shape_cast %24 : vector<1x32x1xbf16> to vector<32x1xbf16>
    %cst_25 = arith.constant dense<0.000000e+00> : vector<32x1xf32>
    %26 = tpu.matmul %13, %25, %cst_25 {dimension_numbers = #tpu.dot_dimension_numbers<[1], [0], [0], [1], [0, 0, 1, 1], [], []>} : vector<32x32xbf16>, vector<32x1xbf16>, vector<32x1xf32> -> vector<32x1xf32>
    %27 = tpu.transpose %26, [1, 0] : vector<32x1xf32> -> vector<1x32xf32>
    %28 = tpu.iota {dimensions = array<i32: 0>} : vector<8x8xi32>
    %29 = tpu.iota {dimensions = array<i32: 1>} : vector<8x8xi32>
    %30 = arith.cmpi eq, %28, %29 : vector<8x8xi32>
    %31 = tpu.iota {dimensions = array<i32: 0>} : vector<8x8xi32>
    %32 = tpu.iota {dimensions = array<i32: 1>} : vector<8x8xi32>
    %33 = arith.cmpi eq, %31, %32 : vector<8x8xi32>
    %34 = vector.extract_strided_slice %8 {offsets = [0, 0], sizes = [16, 32], strides = [1, 1]} : vector<32x32xf32> to vector<16x32xf32>
    %35 = vector.extract_strided_slice %11 {offsets = [0, 0], sizes = [16, 32], strides = [1, 1]} : vector<32x32xf32> to vector<16x32xf32>
    %36 = vector.extract_strided_slice %16 {offsets = [0, 0], sizes = [16, 1], strides = [1, 1]} : vector<32x1xf32> to vector<16x1xf32>
    %37 = vector.extract_strided_slice %19 {offsets = [0, 0], sizes = [16, 1], strides = [1, 1]} : vector<32x1xf32> to vector<16x1xf32>
    %38 = vector.extract_strided_slice %23 {offsets = [0, 0], sizes = [1, 16], strides = [1, 1]} : vector<1x32xf32> to vector<1x16xf32>
    %39 = vector.extract_strided_slice %27 {offsets = [0, 0], sizes = [1, 16], strides = [1, 1]} : vector<1x32xf32> to vector<1x16xf32>
    %cst_26 = arith.constant 0.000000e+00 : f32
    %40 = vector.broadcast %cst_26 : f32 to vector<8x32xf32>
    %cst_27 = arith.constant 0.000000e+00 : f32
    %41 = vector.broadcast %cst_27 : f32 to vector<8x32xf32>
    %42 = arith.truncf %34 : vector<16x32xf32> to vector<16x32xbf16>
    %43 = arith.truncf %35 : vector<16x32xf32> to vector<16x32xbf16>
    %44 = vector.extract_strided_slice %36 {offsets = [0, 0], sizes = [8, 1], strides = [1, 1]} : vector<16x1xf32> to vector<8x1xf32>
    %45 = vector.extract_strided_slice %38 {offsets = [0, 0], sizes = [1, 8], strides = [1, 1]} : vector<1x16xf32> to vector<1x8xf32>
    %46 = vector.broadcast %44 : vector<8x1xf32> to vector<8x8xf32>
    %47 = vector.broadcast %45 : vector<1x8xf32> to vector<8x8xf32>
    %48 = arith.addf %46, %47 : vector<8x8xf32>
    %cst_28 = arith.constant 0.000000e+00 : f32
    %49 = vector.broadcast %cst_28 : f32 to vector<8x8xf32>
    %50 = arith.cmpf oge, %48, %49 : vector<8x8xf32>
    %cst_29 = arith.constant 2.000000e-01 : f32
    %51 = vector.broadcast %cst_29 : f32 to vector<8x8xf32>
    %52 = arith.mulf %51, %48 : vector<8x8xf32>
    %53 = arith.select %50, %48, %52 : vector<8x8xi1>, vector<8x8xf32>
    %54 = vector.extract_strided_slice %37 {offsets = [0, 0], sizes = [8, 1], strides = [1, 1]} : vector<16x1xf32> to vector<8x1xf32>
    %55 = vector.extract_strided_slice %39 {offsets = [0, 8], sizes = [1, 8], strides = [1, 1]} : vector<1x16xf32> to vector<1x8xf32>
    %56 = vector.broadcast %54 : vector<8x1xf32> to vector<8x8xf32>
    %57 = vector.broadcast %55 : vector<1x8xf32> to vector<8x8xf32>
    %58 = arith.addf %56, %57 : vector<8x8xf32>
    %cst_30 = arith.constant 0.000000e+00 : f32
    %59 = vector.broadcast %cst_30 : f32 to vector<8x8xf32>
    %60 = arith.cmpf oge, %58, %59 : vector<8x8xf32>
    %cst_31 = arith.constant 2.000000e-01 : f32
    %61 = vector.broadcast %cst_31 : f32 to vector<8x8xf32>
    %62 = arith.mulf %61, %58 : vector<8x8xf32>
    %63 = arith.select %60, %58, %62 : vector<8x8xi1>, vector<8x8xf32>
    %cst_32 = arith.constant -1.000000e+30 : f32
    %64 = vector.broadcast %cst_32 : f32 to vector<8x8xf32>
    %65 = arith.select %30, %64, %53 : vector<8x8xi1>, vector<8x8xf32>
    %cst_33 = arith.constant dense<0xFF800000> : vector<8xf32>
    %66 = vector.multi_reduction <maximumf>, %65, %cst_33 [1] : vector<8x8xf32> to vector<8xf32>
    %67 = vector.shape_cast %66 : vector<8xf32> to vector<8x1xf32>
    %cst_34 = arith.constant dense<0xFF800000> : vector<8xf32>
    %68 = vector.multi_reduction <maximumf>, %63, %cst_34 [1] : vector<8x8xf32> to vector<8xf32>
    %69 = vector.shape_cast %68 : vector<8xf32> to vector<8x1xf32>
    %70 = arith.maximumf %67, %69 : vector<8x1xf32>
    %71 = vector.broadcast %70 : vector<8x1xf32> to vector<8x8xf32>
    %72 = arith.subf %65, %71 : vector<8x8xf32>
    %73 = math.exp %72 : vector<8x8xf32>
    %74 = vector.broadcast %70 : vector<8x1xf32> to vector<8x8xf32>
    %75 = arith.subf %63, %74 : vector<8x8xf32>
    %76 = math.exp %75 : vector<8x8xf32>
    %cst_35 = arith.constant dense<0.000000e+00> : vector<8xf32>
    %77 = vector.multi_reduction <add>, %73, %cst_35 [1] : vector<8x8xf32> to vector<8xf32>
    %78 = vector.shape_cast %77 : vector<8xf32> to vector<8x1xf32>
    %cst_36 = arith.constant dense<0.000000e+00> : vector<8xf32>
    %79 = vector.multi_reduction <add>, %76, %cst_36 [1] : vector<8x8xf32> to vector<8xf32>
    %80 = vector.shape_cast %79 : vector<8xf32> to vector<8x1xf32>
    %81 = arith.addf %78, %80 : vector<8x1xf32>
    %82 = tpu.reciprocal %81 {approx = true} : vector<8x1xf32> -> vector<8x1xf32>
    %83 = arith.truncf %73 : vector<8x8xf32> to vector<8x8xbf16>
    %84 = vector.extract_strided_slice %42 {offsets = [0, 0], sizes = [8, 32], strides = [1, 1]} : vector<16x32xbf16> to vector<8x32xbf16>
    %cst_37 = arith.constant dense<0.000000e+00> : vector<8x32xf32>
    %85 = tpu.matmul %83, %84, %cst_37 {dimension_numbers = #tpu.dot_dimension_numbers<[1], [0], [0], [1], [0, 0, 1, 1], [], []>} : vector<8x8xbf16>, vector<8x32xbf16>, vector<8x32xf32> -> vector<8x32xf32>
    %86 = arith.truncf %76 : vector<8x8xf32> to vector<8x8xbf16>
    %87 = vector.extract_strided_slice %43 {offsets = [8, 0], sizes = [8, 32], strides = [1, 1]} : vector<16x32xbf16> to vector<8x32xbf16>
    %cst_38 = arith.constant dense<0.000000e+00> : vector<8x32xf32>
    %88 = tpu.matmul %86, %87, %cst_38 {dimension_numbers = #tpu.dot_dimension_numbers<[1], [0], [0], [1], [0, 0, 1, 1], [], []>} : vector<8x8xbf16>, vector<8x32xbf16>, vector<8x32xf32> -> vector<8x32xf32>
    %89 = arith.addf %85, %88 : vector<8x32xf32>
    %90 = vector.broadcast %82 : vector<8x1xf32> to vector<8x32xf32>
    %91 = arith.mulf %89, %90 : vector<8x32xf32>
    %92 = arith.addf %40, %91 : vector<8x32xf32>
    %93 = vector.extract_strided_slice %37 {offsets = [8, 0], sizes = [8, 1], strides = [1, 1]} : vector<16x1xf32> to vector<8x1xf32>
    %94 = vector.extract_strided_slice %39 {offsets = [0, 0], sizes = [1, 8], strides = [1, 1]} : vector<1x16xf32> to vector<1x8xf32>
    %95 = vector.broadcast %93 : vector<8x1xf32> to vector<8x8xf32>
    %96 = vector.broadcast %94 : vector<1x8xf32> to vector<8x8xf32>
    %97 = arith.addf %95, %96 : vector<8x8xf32>
    %cst_39 = arith.constant 0.000000e+00 : f32
    %98 = vector.broadcast %cst_39 : f32 to vector<8x8xf32>
    %99 = arith.cmpf oge, %97, %98 : vector<8x8xf32>
    %cst_40 = arith.constant 2.000000e-01 : f32
    %100 = vector.broadcast %cst_40 : f32 to vector<8x8xf32>
    %101 = arith.mulf %100, %97 : vector<8x8xf32>
    %102 = arith.select %99, %97, %101 : vector<8x8xi1>, vector<8x8xf32>
    %103 = vector.extract_strided_slice %36 {offsets = [8, 0], sizes = [8, 1], strides = [1, 1]} : vector<16x1xf32> to vector<8x1xf32>
    %104 = vector.extract_strided_slice %38 {offsets = [0, 8], sizes = [1, 8], strides = [1, 1]} : vector<1x16xf32> to vector<1x8xf32>
    %105 = vector.broadcast %103 : vector<8x1xf32> to vector<8x8xf32>
    %106 = vector.broadcast %104 : vector<1x8xf32> to vector<8x8xf32>
    %107 = arith.addf %105, %106 : vector<8x8xf32>
    %cst_41 = arith.constant 0.000000e+00 : f32
    %108 = vector.broadcast %cst_41 : f32 to vector<8x8xf32>
    %109 = arith.cmpf oge, %107, %108 : vector<8x8xf32>
    %cst_42 = arith.constant 2.000000e-01 : f32
    %110 = vector.broadcast %cst_42 : f32 to vector<8x8xf32>
    %111 = arith.mulf %110, %107 : vector<8x8xf32>
    %112 = arith.select %109, %107, %111 : vector<8x8xi1>, vector<8x8xf32>
    %cst_43 = arith.constant -1.000000e+30 : f32
    %113 = vector.broadcast %cst_43 : f32 to vector<8x8xf32>
    %114 = arith.select %33, %113, %112 : vector<8x8xi1>, vector<8x8xf32>
    %cst_44 = arith.constant dense<0xFF800000> : vector<8xf32>
    %115 = vector.multi_reduction <maximumf>, %102, %cst_44 [1] : vector<8x8xf32> to vector<8xf32>
    %116 = vector.shape_cast %115 : vector<8xf32> to vector<8x1xf32>
    %cst_45 = arith.constant dense<0xFF800000> : vector<8xf32>
    %117 = vector.multi_reduction <maximumf>, %114, %cst_45 [1] : vector<8x8xf32> to vector<8xf32>
    %118 = vector.shape_cast %117 : vector<8xf32> to vector<8x1xf32>
    %119 = arith.maximumf %116, %118 : vector<8x1xf32>
    %120 = vector.broadcast %119 : vector<8x1xf32> to vector<8x8xf32>
    %121 = arith.subf %102, %120 : vector<8x8xf32>
    %122 = math.exp %121 : vector<8x8xf32>
    %123 = vector.broadcast %119 : vector<8x1xf32> to vector<8x8xf32>
    %124 = arith.subf %114, %123 : vector<8x8xf32>
    %125 = math.exp %124 : vector<8x8xf32>
    %cst_46 = arith.constant dense<0.000000e+00> : vector<8xf32>
    %126 = vector.multi_reduction <add>, %122, %cst_46 [1] : vector<8x8xf32> to vector<8xf32>
    %127 = vector.shape_cast %126 : vector<8xf32> to vector<8x1xf32>
    %cst_47 = arith.constant dense<0.000000e+00> : vector<8xf32>
    %128 = vector.multi_reduction <add>, %125, %cst_47 [1] : vector<8x8xf32> to vector<8xf32>
    %129 = vector.shape_cast %128 : vector<8xf32> to vector<8x1xf32>
    %130 = arith.addf %127, %129 : vector<8x1xf32>
    %131 = tpu.reciprocal %130 {approx = true} : vector<8x1xf32> -> vector<8x1xf32>
    %132 = arith.truncf %122 : vector<8x8xf32> to vector<8x8xbf16>
    %133 = vector.extract_strided_slice %43 {offsets = [0, 0], sizes = [8, 32], strides = [1, 1]} : vector<16x32xbf16> to vector<8x32xbf16>
    %cst_48 = arith.constant dense<0.000000e+00> : vector<8x32xf32>
    %134 = tpu.matmul %132, %133, %cst_48 {dimension_numbers = #tpu.dot_dimension_numbers<[1], [0], [0], [1], [0, 0, 1, 1], [], []>} : vector<8x8xbf16>, vector<8x32xbf16>, vector<8x32xf32> -> vector<8x32xf32>
    %135 = arith.truncf %125 : vector<8x8xf32> to vector<8x8xbf16>
    %136 = vector.extract_strided_slice %42 {offsets = [8, 0], sizes = [8, 32], strides = [1, 1]} : vector<16x32xbf16> to vector<8x32xbf16>
    %cst_49 = arith.constant dense<0.000000e+00> : vector<8x32xf32>
    %137 = tpu.matmul %135, %136, %cst_49 {dimension_numbers = #tpu.dot_dimension_numbers<[1], [0], [0], [1], [0, 0, 1, 1], [], []>} : vector<8x8xbf16>, vector<8x32xbf16>, vector<8x32xf32> -> vector<8x32xf32>
    %138 = arith.addf %134, %137 : vector<8x32xf32>
    %139 = vector.broadcast %131 : vector<8x1xf32> to vector<8x32xf32>
    %140 = arith.mulf %138, %139 : vector<8x32xf32>
    %141 = arith.addf %41, %140 : vector<8x32xf32>
    %142 = vector.extract_strided_slice %8 {offsets = [16, 0], sizes = [16, 32], strides = [1, 1]} : vector<32x32xf32> to vector<16x32xf32>
    %143 = vector.extract_strided_slice %11 {offsets = [16, 0], sizes = [16, 32], strides = [1, 1]} : vector<32x32xf32> to vector<16x32xf32>
    %144 = vector.extract_strided_slice %16 {offsets = [16, 0], sizes = [16, 1], strides = [1, 1]} : vector<32x1xf32> to vector<16x1xf32>
    %145 = vector.extract_strided_slice %19 {offsets = [16, 0], sizes = [16, 1], strides = [1, 1]} : vector<32x1xf32> to vector<16x1xf32>
    %146 = vector.extract_strided_slice %23 {offsets = [0, 16], sizes = [1, 16], strides = [1, 1]} : vector<1x32xf32> to vector<1x16xf32>
    %147 = vector.extract_strided_slice %27 {offsets = [0, 16], sizes = [1, 16], strides = [1, 1]} : vector<1x32xf32> to vector<1x16xf32>
    %cst_50 = arith.constant 0.000000e+00 : f32
    %148 = vector.broadcast %cst_50 : f32 to vector<8x32xf32>
    %cst_51 = arith.constant 0.000000e+00 : f32
    %149 = vector.broadcast %cst_51 : f32 to vector<8x32xf32>
    %150 = arith.truncf %142 : vector<16x32xf32> to vector<16x32xbf16>
    %151 = arith.truncf %143 : vector<16x32xf32> to vector<16x32xbf16>
    %152 = vector.extract_strided_slice %144 {offsets = [0, 0], sizes = [8, 1], strides = [1, 1]} : vector<16x1xf32> to vector<8x1xf32>
    %153 = vector.extract_strided_slice %146 {offsets = [0, 0], sizes = [1, 8], strides = [1, 1]} : vector<1x16xf32> to vector<1x8xf32>
    %154 = vector.broadcast %152 : vector<8x1xf32> to vector<8x8xf32>
    %155 = vector.broadcast %153 : vector<1x8xf32> to vector<8x8xf32>
    %156 = arith.addf %154, %155 : vector<8x8xf32>
    %cst_52 = arith.constant 0.000000e+00 : f32
    %157 = vector.broadcast %cst_52 : f32 to vector<8x8xf32>
    %158 = arith.cmpf oge, %156, %157 : vector<8x8xf32>
    %cst_53 = arith.constant 2.000000e-01 : f32
    %159 = vector.broadcast %cst_53 : f32 to vector<8x8xf32>
    %160 = arith.mulf %159, %156 : vector<8x8xf32>
    %161 = arith.select %158, %156, %160 : vector<8x8xi1>, vector<8x8xf32>
    %162 = vector.extract_strided_slice %145 {offsets = [0, 0], sizes = [8, 1], strides = [1, 1]} : vector<16x1xf32> to vector<8x1xf32>
    %163 = vector.extract_strided_slice %147 {offsets = [0, 8], sizes = [1, 8], strides = [1, 1]} : vector<1x16xf32> to vector<1x8xf32>
    %164 = vector.broadcast %162 : vector<8x1xf32> to vector<8x8xf32>
    %165 = vector.broadcast %163 : vector<1x8xf32> to vector<8x8xf32>
    %166 = arith.addf %164, %165 : vector<8x8xf32>
    %cst_54 = arith.constant 0.000000e+00 : f32
    %167 = vector.broadcast %cst_54 : f32 to vector<8x8xf32>
    %168 = arith.cmpf oge, %166, %167 : vector<8x8xf32>
    %cst_55 = arith.constant 2.000000e-01 : f32
    %169 = vector.broadcast %cst_55 : f32 to vector<8x8xf32>
    %170 = arith.mulf %169, %166 : vector<8x8xf32>
    %171 = arith.select %168, %166, %170 : vector<8x8xi1>, vector<8x8xf32>
    %cst_56 = arith.constant -1.000000e+30 : f32
    %172 = vector.broadcast %cst_56 : f32 to vector<8x8xf32>
    %173 = arith.select %30, %172, %161 : vector<8x8xi1>, vector<8x8xf32>
    %cst_57 = arith.constant dense<0xFF800000> : vector<8xf32>
    %174 = vector.multi_reduction <maximumf>, %173, %cst_57 [1] : vector<8x8xf32> to vector<8xf32>
    %175 = vector.shape_cast %174 : vector<8xf32> to vector<8x1xf32>
    %cst_58 = arith.constant dense<0xFF800000> : vector<8xf32>
    %176 = vector.multi_reduction <maximumf>, %171, %cst_58 [1] : vector<8x8xf32> to vector<8xf32>
    %177 = vector.shape_cast %176 : vector<8xf32> to vector<8x1xf32>
    %178 = arith.maximumf %175, %177 : vector<8x1xf32>
    %179 = vector.broadcast %178 : vector<8x1xf32> to vector<8x8xf32>
    %180 = arith.subf %173, %179 : vector<8x8xf32>
    %181 = math.exp %180 : vector<8x8xf32>
    %182 = vector.broadcast %178 : vector<8x1xf32> to vector<8x8xf32>
    %183 = arith.subf %171, %182 : vector<8x8xf32>
    %184 = math.exp %183 : vector<8x8xf32>
    %cst_59 = arith.constant dense<0.000000e+00> : vector<8xf32>
    %185 = vector.multi_reduction <add>, %181, %cst_59 [1] : vector<8x8xf32> to vector<8xf32>
    %186 = vector.shape_cast %185 : vector<8xf32> to vector<8x1xf32>
    %cst_60 = arith.constant dense<0.000000e+00> : vector<8xf32>
    %187 = vector.multi_reduction <add>, %184, %cst_60 [1] : vector<8x8xf32> to vector<8xf32>
    %188 = vector.shape_cast %187 : vector<8xf32> to vector<8x1xf32>
    %189 = arith.addf %186, %188 : vector<8x1xf32>
    %190 = tpu.reciprocal %189 {approx = true} : vector<8x1xf32> -> vector<8x1xf32>
    %191 = arith.truncf %181 : vector<8x8xf32> to vector<8x8xbf16>
    %192 = vector.extract_strided_slice %150 {offsets = [0, 0], sizes = [8, 32], strides = [1, 1]} : vector<16x32xbf16> to vector<8x32xbf16>
    %cst_61 = arith.constant dense<0.000000e+00> : vector<8x32xf32>
    %193 = tpu.matmul %191, %192, %cst_61 {dimension_numbers = #tpu.dot_dimension_numbers<[1], [0], [0], [1], [0, 0, 1, 1], [], []>} : vector<8x8xbf16>, vector<8x32xbf16>, vector<8x32xf32> -> vector<8x32xf32>
    %194 = arith.truncf %184 : vector<8x8xf32> to vector<8x8xbf16>
    %195 = vector.extract_strided_slice %151 {offsets = [8, 0], sizes = [8, 32], strides = [1, 1]} : vector<16x32xbf16> to vector<8x32xbf16>
    %cst_62 = arith.constant dense<0.000000e+00> : vector<8x32xf32>
    %196 = tpu.matmul %194, %195, %cst_62 {dimension_numbers = #tpu.dot_dimension_numbers<[1], [0], [0], [1], [0, 0, 1, 1], [], []>} : vector<8x8xbf16>, vector<8x32xbf16>, vector<8x32xf32> -> vector<8x32xf32>
    %197 = arith.addf %193, %196 : vector<8x32xf32>
    %198 = vector.broadcast %190 : vector<8x1xf32> to vector<8x32xf32>
    %199 = arith.mulf %197, %198 : vector<8x32xf32>
    %200 = arith.addf %148, %199 : vector<8x32xf32>
    %201 = vector.extract_strided_slice %145 {offsets = [8, 0], sizes = [8, 1], strides = [1, 1]} : vector<16x1xf32> to vector<8x1xf32>
    %202 = vector.extract_strided_slice %147 {offsets = [0, 0], sizes = [1, 8], strides = [1, 1]} : vector<1x16xf32> to vector<1x8xf32>
    %203 = vector.broadcast %201 : vector<8x1xf32> to vector<8x8xf32>
    %204 = vector.broadcast %202 : vector<1x8xf32> to vector<8x8xf32>
    %205 = arith.addf %203, %204 : vector<8x8xf32>
    %cst_63 = arith.constant 0.000000e+00 : f32
    %206 = vector.broadcast %cst_63 : f32 to vector<8x8xf32>
    %207 = arith.cmpf oge, %205, %206 : vector<8x8xf32>
    %cst_64 = arith.constant 2.000000e-01 : f32
    %208 = vector.broadcast %cst_64 : f32 to vector<8x8xf32>
    %209 = arith.mulf %208, %205 : vector<8x8xf32>
    %210 = arith.select %207, %205, %209 : vector<8x8xi1>, vector<8x8xf32>
    %211 = vector.extract_strided_slice %144 {offsets = [8, 0], sizes = [8, 1], strides = [1, 1]} : vector<16x1xf32> to vector<8x1xf32>
    %212 = vector.extract_strided_slice %146 {offsets = [0, 8], sizes = [1, 8], strides = [1, 1]} : vector<1x16xf32> to vector<1x8xf32>
    %213 = vector.broadcast %211 : vector<8x1xf32> to vector<8x8xf32>
    %214 = vector.broadcast %212 : vector<1x8xf32> to vector<8x8xf32>
    %215 = arith.addf %213, %214 : vector<8x8xf32>
    %cst_65 = arith.constant 0.000000e+00 : f32
    %216 = vector.broadcast %cst_65 : f32 to vector<8x8xf32>
    %217 = arith.cmpf oge, %215, %216 : vector<8x8xf32>
    %cst_66 = arith.constant 2.000000e-01 : f32
    %218 = vector.broadcast %cst_66 : f32 to vector<8x8xf32>
    %219 = arith.mulf %218, %215 : vector<8x8xf32>
    %220 = arith.select %217, %215, %219 : vector<8x8xi1>, vector<8x8xf32>
    %cst_67 = arith.constant -1.000000e+30 : f32
    %221 = vector.broadcast %cst_67 : f32 to vector<8x8xf32>
    %222 = arith.select %33, %221, %220 : vector<8x8xi1>, vector<8x8xf32>
    %cst_68 = arith.constant dense<0xFF800000> : vector<8xf32>
    %223 = vector.multi_reduction <maximumf>, %210, %cst_68 [1] : vector<8x8xf32> to vector<8xf32>
    %224 = vector.shape_cast %223 : vector<8xf32> to vector<8x1xf32>
    %cst_69 = arith.constant dense<0xFF800000> : vector<8xf32>
    %225 = vector.multi_reduction <maximumf>, %222, %cst_69 [1] : vector<8x8xf32> to vector<8xf32>
    %226 = vector.shape_cast %225 : vector<8xf32> to vector<8x1xf32>
    %227 = arith.maximumf %224, %226 : vector<8x1xf32>
    %228 = vector.broadcast %227 : vector<8x1xf32> to vector<8x8xf32>
    %229 = arith.subf %210, %228 : vector<8x8xf32>
    %230 = math.exp %229 : vector<8x8xf32>
    %231 = vector.broadcast %227 : vector<8x1xf32> to vector<8x8xf32>
    %232 = arith.subf %222, %231 : vector<8x8xf32>
    %233 = math.exp %232 : vector<8x8xf32>
    %cst_70 = arith.constant dense<0.000000e+00> : vector<8xf32>
    %234 = vector.multi_reduction <add>, %230, %cst_70 [1] : vector<8x8xf32> to vector<8xf32>
    %235 = vector.shape_cast %234 : vector<8xf32> to vector<8x1xf32>
    %cst_71 = arith.constant dense<0.000000e+00> : vector<8xf32>
    %236 = vector.multi_reduction <add>, %233, %cst_71 [1] : vector<8x8xf32> to vector<8xf32>
    %237 = vector.shape_cast %236 : vector<8xf32> to vector<8x1xf32>
    %238 = arith.addf %235, %237 : vector<8x1xf32>
    %239 = tpu.reciprocal %238 {approx = true} : vector<8x1xf32> -> vector<8x1xf32>
    %240 = arith.truncf %230 : vector<8x8xf32> to vector<8x8xbf16>
    %241 = vector.extract_strided_slice %151 {offsets = [0, 0], sizes = [8, 32], strides = [1, 1]} : vector<16x32xbf16> to vector<8x32xbf16>
    %cst_72 = arith.constant dense<0.000000e+00> : vector<8x32xf32>
    %242 = tpu.matmul %240, %241, %cst_72 {dimension_numbers = #tpu.dot_dimension_numbers<[1], [0], [0], [1], [0, 0, 1, 1], [], []>} : vector<8x8xbf16>, vector<8x32xbf16>, vector<8x32xf32> -> vector<8x32xf32>
    %243 = arith.truncf %233 : vector<8x8xf32> to vector<8x8xbf16>
    %244 = vector.extract_strided_slice %150 {offsets = [8, 0], sizes = [8, 32], strides = [1, 1]} : vector<16x32xbf16> to vector<8x32xbf16>
    %cst_73 = arith.constant dense<0.000000e+00> : vector<8x32xf32>
    %245 = tpu.matmul %243, %244, %cst_73 {dimension_numbers = #tpu.dot_dimension_numbers<[1], [0], [0], [1], [0, 0, 1, 1], [], []>} : vector<8x8xbf16>, vector<8x32xbf16>, vector<8x32xf32> -> vector<8x32xf32>
    %246 = arith.addf %242, %245 : vector<8x32xf32>
    %247 = vector.broadcast %239 : vector<8x1xf32> to vector<8x32xf32>
    %248 = arith.mulf %246, %247 : vector<8x32xf32>
    %249 = arith.addf %149, %248 : vector<8x32xf32>
    %250 = tpu.concatenate %92, %141, %200, %249 in 0 : vector<8x32xf32>, vector<8x32xf32>, vector<8x32xf32>, vector<8x32xf32> -> vector<32x32xf32>
    %cst_74 = arith.constant 1.000000e+00 : f32
    %251 = vector.broadcast %cst_74 : f32 to vector<32x32xf32>
    %252 = arith.mulf %250, %251 : vector<32x32xf32>
    %c0_75 = arith.constant 0 : index
    %c0_76 = arith.constant 0 : index
    %c0_77 = arith.constant 0 : index
    %253 = vector.load %arg6[%c0_75, %c0_76, %c0_77] : memref<1x1x32xf32, #tpu.memory_space<vmem>>, vector<1x1x32xf32>
    %254 = vector.shape_cast %253 : vector<1x1x32xf32> to vector<1x32xf32>
    %255 = vector.broadcast %254 : vector<1x32xf32> to vector<32x32xf32>
    %256 = arith.addf %252, %255 : vector<32x32xf32>
    %257 = arith.truncf %256 : vector<32x32xf32> to vector<32x32xbf16>
    %c0_78 = arith.constant 0 : index
    %c0_79 = arith.constant 0 : index
    %c0_80 = arith.constant 0 : index
    %258 = vector.load %arg7[%c0_78, %c0_79, %c0_80] : memref<1x32x64xbf16, #tpu.memory_space<vmem>>, vector<1x32x64xbf16>
    %259 = vector.shape_cast %258 : vector<1x32x64xbf16> to vector<32x64xbf16>
    %cst_81 = arith.constant dense<0.000000e+00> : vector<32x64xf32>
    %260 = tpu.matmul %5, %259, %cst_81 {dimension_numbers = #tpu.dot_dimension_numbers<[1], [0], [0], [1], [0, 0, 1, 1], [], []>} : vector<32x32xbf16>, vector<32x64xbf16>, vector<32x64xf32> -> vector<32x64xf32>
    %c0_82 = arith.constant 0 : index
    %c0_83 = arith.constant 0 : index
    %c0_84 = arith.constant 0 : index
    %261 = vector.load %arg8[%c0_82, %c0_83, %c0_84] : memref<1x32x64xbf16, #tpu.memory_space<vmem>>, vector<1x32x64xbf16>
    %262 = vector.shape_cast %261 : vector<1x32x64xbf16> to vector<32x64xbf16>
    %cst_85 = arith.constant dense<0.000000e+00> : vector<32x64xf32>
    %263 = tpu.matmul %257, %262, %cst_85 {dimension_numbers = #tpu.dot_dimension_numbers<[1], [0], [0], [1], [0, 0, 1, 1], [], []>} : vector<32x32xbf16>, vector<32x64xbf16>, vector<32x64xf32> -> vector<32x64xf32>
    %264 = arith.addf %260, %263 : vector<32x64xf32>
    %c0_86 = arith.constant 0 : index
    %c0_87 = arith.constant 0 : index
    %c0_88 = arith.constant 0 : index
    %265 = vector.load %arg9[%c0_86, %c0_87, %c0_88] : memref<1x1x64xf32, #tpu.memory_space<vmem>>, vector<1x1x64xf32>
    %266 = vector.shape_cast %265 : vector<1x1x64xf32> to vector<1x64xf32>
    %267 = vector.broadcast %266 : vector<1x64xf32> to vector<32x64xf32>
    %268 = arith.addf %264, %267 : vector<32x64xf32>
    %cst_89 = arith.constant dense<0.000000e+00> : vector<64xf32>
    %269 = vector.multi_reduction <add>, %268, %cst_89 [0] : vector<32x64xf32> to vector<64xf32>
    %270 = vector.shape_cast %269 : vector<64xf32> to vector<1x64xf32>
    %cst_90 = arith.constant 3.200000e+01 : f32
    %271 = vector.broadcast %cst_90 : f32 to vector<1x64xf32>
    %272 = arith.divf %270, %271 : vector<1x64xf32>
    %273 = vector.broadcast %272 : vector<1x64xf32> to vector<32x64xf32>
    %274 = arith.subf %268, %273 : vector<32x64xf32>
    %275 = arith.mulf %274, %274 : vector<32x64xf32>
    %cst_91 = arith.constant dense<0.000000e+00> : vector<64xf32>
    %276 = vector.multi_reduction <add>, %275, %cst_91 [0] : vector<32x64xf32> to vector<64xf32>
    %277 = vector.shape_cast %276 : vector<64xf32> to vector<1x64xf32>
    %cst_92 = arith.constant 3.200000e+01 : f32
    %278 = vector.broadcast %cst_92 : f32 to vector<1x64xf32>
    %279 = arith.divf %277, %278 : vector<1x64xf32>
    %280 = vector.broadcast %272 : vector<1x64xf32> to vector<32x64xf32>
    %281 = arith.subf %268, %280 : vector<32x64xf32>
    %cst_93 = arith.constant 9.99999974E-6 : f32
    %282 = vector.broadcast %cst_93 : f32 to vector<1x64xf32>
    %283 = arith.addf %279, %282 : vector<1x64xf32>
    %284 = math.rsqrt %283 : vector<1x64xf32>
    %285 = vector.broadcast %284 : vector<1x64xf32> to vector<32x64xf32>
    %286 = arith.mulf %281, %285 : vector<32x64xf32>
    %c0_94 = arith.constant 0 : index
    %c0_95 = arith.constant 0 : index
    %c0_96 = arith.constant 0 : index
    %287 = vector.load %arg10[%c0_94, %c0_95, %c0_96] : memref<1x1x64xf32, #tpu.memory_space<vmem>>, vector<1x1x64xf32>
    %288 = vector.shape_cast %287 : vector<1x1x64xf32> to vector<1x64xf32>
    %289 = vector.broadcast %288 : vector<1x64xf32> to vector<32x64xf32>
    %290 = arith.mulf %286, %289 : vector<32x64xf32>
    %c0_97 = arith.constant 0 : index
    %c0_98 = arith.constant 0 : index
    %c0_99 = arith.constant 0 : index
    %291 = vector.load %arg11[%c0_97, %c0_98, %c0_99] : memref<1x1x64xf32, #tpu.memory_space<vmem>>, vector<1x1x64xf32>
    %292 = vector.shape_cast %291 : vector<1x1x64xf32> to vector<1x64xf32>
    %293 = vector.broadcast %292 : vector<1x64xf32> to vector<32x64xf32>
    %294 = arith.addf %290, %293 : vector<32x64xf32>
    %cst_100 = arith.constant 0.000000e+00 : f32
    %295 = vector.broadcast %cst_100 : f32 to vector<32x64xf32>
    %296 = arith.maximumf %294, %295 : vector<32x64xf32>
    %297 = arith.truncf %296 : vector<32x64xf32> to vector<32x64xbf16>
    %c0_101 = arith.constant 0 : index
    %c0_102 = arith.constant 0 : index
    %c0_103 = arith.constant 0 : index
    %298 = vector.load %arg12[%c0_101, %c0_102, %c0_103] : memref<1x64x32xbf16, #tpu.memory_space<vmem>>, vector<1x64x32xbf16>
    %299 = vector.shape_cast %298 : vector<1x64x32xbf16> to vector<64x32xbf16>
    %cst_104 = arith.constant dense<0.000000e+00> : vector<32x32xf32>
    %300 = tpu.matmul %297, %299, %cst_104 {dimension_numbers = #tpu.dot_dimension_numbers<[1], [0], [0], [1], [0, 0, 1, 1], [], []>} : vector<32x64xbf16>, vector<64x32xbf16>, vector<32x32xf32> -> vector<32x32xf32>
    %c0_105 = arith.constant 0 : index
    %c0_106 = arith.constant 0 : index
    %c0_107 = arith.constant 0 : index
    %301 = vector.load %arg13[%c0_105, %c0_106, %c0_107] : memref<1x1x32xf32, #tpu.memory_space<vmem>>, vector<1x1x32xf32>
    %302 = vector.shape_cast %301 : vector<1x1x32xf32> to vector<1x32xf32>
    %303 = vector.broadcast %302 : vector<1x32xf32> to vector<32x32xf32>
    %304 = arith.addf %300, %303 : vector<32x32xf32>
    %305 = arith.addf %4, %304 : vector<32x32xf32>
    %306 = vector.shape_cast %305 : vector<32x32xf32> to vector<2x16x32xf32>
    %c0_108 = arith.constant 0 : index
    %c0_109 = arith.constant 0 : index
    %c0_110 = arith.constant 0 : index
    %307 = vector.load %arg15[%c0_108, %c0_109, %c0_110] : memref<2x16x32xf32, #tpu.memory_space<vmem>>, vector<2x16x32xf32>
    tpu.vector_store %arg15[%c0_108, %c0_109, %c0_110], %306 {strides = array<i32>} : memref<2x16x32xf32, #tpu.memory_space<vmem>>, vector<2x16x32xf32>,
    %c1_i32 = arith.constant 1 : i32
    %308 = arith.cmpi eq, %arg0, %c1_i32 : i32
    %309 = arith.extui %308 : i1 to i32
    %c0_i32_111 = arith.constant 0 : i32
    %310 = arith.cmpi ne, %309, %c0_i32_111 : i32
    scf.if %310 {
      %c0_112 = arith.constant 0 : index
      %c0_113 = arith.constant 0 : index
      %c0_114 = arith.constant 0 : index
      %311 = vector.load %arg15[%c0_112, %c0_113, %c0_114] : memref<2x16x32xf32, #tpu.memory_space<vmem>>, vector<2x16x32xf32>
      %c0_115 = arith.constant 0 : index
      %c0_116 = arith.constant 0 : index
      %c0_117 = arith.constant 0 : index
      %312 = vector.load %arg14[%c0_115, %c0_116, %c0_117] : memref<2x16x32xf32, #tpu.memory_space<vmem>>, vector<2x16x32xf32>
      tpu.vector_store %arg14[%c0_115, %c0_116, %c0_117], %311 {strides = array<i32>} : memref<2x16x32xf32, #tpu.memory_space<vmem>>, vector<2x16x32xf32>,
    } else {
    }
    return
  }
  func.func @transform_0(%arg0: i32) -> (i32, i32, i32) {
    %c0_i32 = arith.constant 0 : i32
    %c0_i32_0 = arith.constant 0 : i32
    %c0_i32_1 = arith.constant 0 : i32
    %c0_i32_2 = arith.constant 0 : i32
    return %c0_i32, %c0_i32_0, %c0_i32_1 : i32, i32, i32
  }
  func.func @transform_1(%arg0: i32) -> (i32, i32, i32) {
    %c0_i32 = arith.constant 0 : i32
    %c0_i32_0 = arith.constant 0 : i32
    %c0_i32_1 = arith.constant 0 : i32
    return %arg0, %c0_i32, %c0_i32_0 : i32, i32, i32
  }
  func.func @transform_2(%arg0: i32) -> (i32, i32, i32) {
    %c0_i32 = arith.constant 0 : i32
    %c0_i32_0 = arith.constant 0 : i32
    %c0_i32_1 = arith.constant 0 : i32
    return %arg0, %c0_i32, %c0_i32_0 : i32, i32, i32
  }
  func.func @transform_3(%arg0: i32) -> (i32, i32, i32) {
    %c0_i32 = arith.constant 0 : i32
    %c0_i32_0 = arith.constant 0 : i32
    %c0_i32_1 = arith.constant 0 : i32
    return %arg0, %c0_i32, %c0_i32_0 : i32, i32, i32
  }
  func.func @transform_4(%arg0: i32) -> (i32, i32, i32) {
    %c0_i32 = arith.constant 0 : i32
    %c0_i32_0 = arith.constant 0 : i32
    %c0_i32_1 = arith.constant 0 : i32
    return %arg0, %c0_i32, %c0_i32_0 : i32, i32, i32
  }
  func.func @transform_5(%arg0: i32) -> (i32, i32, i32) {
    %c0_i32 = arith.constant 0 : i32
    %c0_i32_0 = arith.constant 0 : i32
    %c0_i32_1 = arith.constant 0 : i32
    return %arg0, %c0_i32, %c0_i32_0 : i32, i32, i32
  }
  func.func @transform_6(%arg0: i32) -> (i32, i32, i32) {
    %c0_i32 = arith.constant 0 : i32
    %c0_i32_0 = arith.constant 0 : i32
    %c0_i32_1 = arith.constant 0 : i32
    return %arg0, %c0_i32, %c0_i32_0 : i32, i32, i32
  }
  func.func @transform_7(%arg0: i32) -> (i32, i32, i32) {
    %c0_i32 = arith.constant 0 : i32
    %c0_i32_0 = arith.constant 0 : i32
    %c0_i32_1 = arith.constant 0 : i32
    return %arg0, %c0_i32, %c0_i32_0 : i32, i32, i32
  }
  func.func @transform_8(%arg0: i32) -> (i32, i32, i32) {
    %c0_i32 = arith.constant 0 : i32
    %c0_i32_0 = arith.constant 0 : i32
    %c0_i32_1 = arith.constant 0 : i32
    return %arg0, %c0_i32, %c0_i32_0 : i32, i32, i32
  }
  func.func @transform_9(%arg0: i32) -> (i32, i32, i32) {
    %c0_i32 = arith.constant 0 : i32
    %c0_i32_0 = arith.constant 0 : i32
    %c0_i32_1 = arith.constant 0 : i32
    return %arg0, %c0_i32, %c0_i32_0 : i32, i32, i32
  }
  func.func @transform_10(%arg0: i32) -> (i32, i32, i32) {
    %c0_i32 = arith.constant 0 : i32
    %c0_i32_0 = arith.constant 0 : i32
    %c0_i32_1 = arith.constant 0 : i32
    return %arg0, %c0_i32, %c0_i32_0 : i32, i32, i32
  }
  func.func @transform_11(%arg0: i32) -> (i32, i32, i32) {
    %c0_i32 = arith.constant 0 : i32
    %c0_i32_0 = arith.constant 0 : i32
    %c0_i32_1 = arith.constant 0 : i32
    return %arg0, %c0_i32, %c0_i32_0 : i32, i32, i32
  }
  func.func @transform_12(%arg0: i32) -> (i32, i32, i32) {
    %c0_i32 = arith.constant 0 : i32
    %c0_i32_0 = arith.constant 0 : i32
    %c0_i32_1 = arith.constant 0 : i32
    return %arg0, %c0_i32, %c0_i32_0 : i32, i32, i32
  }
  func.func @transform_13(%arg0: i32) -> (i32, i32, i32) {
    %c0_i32 = arith.constant 0 : i32
    %c0_i32_0 = arith.constant 0 : i32
    %c0_i32_1 = arith.constant 0 : i32
    %c0_i32_2 = arith.constant 0 : i32
    return %c0_i32, %c0_i32_0, %c0_i32_1 : i32, i32, i32
  }
}

</mosaic_0001>

<llo_original>
// kernel: rgat_forward.1
$region0: #{rgat_forward.1}
  #allocation0 [shape = 'u32[]', space=smem, size = 0x4, offset = 0x4, fixed_abs, tag = 'smem constant byte address 0x4 - core index']
  #allocation1 [shape = 'u32[144,128]{1,0:T(1,128)}', space=vmem, size = 0x12000, scoped, tag = 'internal scratch']
  #allocation2 [shape = 'f32[2,16,32]{2,1,0:T(8,128)}', space=vmem, size = 0x4000, scoped, tag = 'scratch operand']
  %s0 = inlined_call_operand.vmem [shape: f32[2,16,32], index: 0, kind: input, shape index: {}]
  %s1 = inlined_call_operand.vmem [shape: bf16[2,32,32], index: 1, kind: input, shape index: {}]
  %s2 = inlined_call_operand.vmem [shape: bf16[2,32,32], index: 2, kind: input, shape index: {}]
  %s3 = inlined_call_operand.vmem [shape: bf16[2,32,1], index: 3, kind: input, shape index: {}]
  %s4 = inlined_call_operand.vmem [shape: bf16[2,32,1], index: 4, kind: input, shape index: {}]
  %s5 = inlined_call_operand.vmem [shape: f32[2,1,32], index: 5, kind: input, shape index: {}]
  %s6 = inlined_call_operand.vmem [shape: bf16[2,32,64], index: 6, kind: input, shape index: {}]
  %s7 = inlined_call_operand.vmem [shape: bf16[2,32,64], index: 7, kind: input, shape index: {}]
  %s8 = inlined_call_operand.vmem [shape: f32[2,1,64], index: 8, kind: input, shape index: {}]
  %s9 = inlined_call_operand.vmem [shape: f32[2,1,64], index: 9, kind: input, shape index: {}]
  %s10 = inlined_call_operand.vmem [shape: f32[2,1,64], index: 10, kind: input, shape index: {}]
  %s11 = inlined_call_operand.vmem [shape: bf16[2,64,32], index: 11, kind: input, shape index: {}]
  %s12 = inlined_call_operand.vmem [shape: f32[2,1,32], index: 12, kind: input, shape index: {}]
  %s13 = inlined_call_operand.vmem [shape: f32[2,16,32], index: 13, kind: output, shape index: {}]
  %s14 = sld [smem:[#allocation0]]
  $region93: #{rgat_forward.1} parent=0
    _
  %s16 = ssub.s32 1, %s14
  %s17 = scalar_select 0, %s16, %s14
  loop: start=0, step=1, limit=4
  $region2: #{rgat_forward.1} parent=0 // loop_pre_header
    _
  $region3: #{rgat_forward.1} parent=0 // loop_header
    %s19 = sphi 0, %s23
    %p20 = scmp.ge.s32.totalorder %s19, 4
    %s27 = sphi 0, %s27
    %s29 = sphi 0, %s27
    %s30 = sphi 0, %s29
    %s44 = sphi 0, %s30
    %s50 = sphi 0, %s52
    %s53 = sphi 0, %s50
    %s54 = sphi 0, %s53
    %s70 = sphi 0, %s54
    %s76 = sphi 0, %s78
    %s79 = sphi 0, %s76
    %s80 = sphi 0, %s79
    %s96 = sphi 0, %s80
    %s102 = sphi 0, %s104
    %s105 = sphi 0, %s102
    %s106 = sphi 0, %s105
    %s122 = sphi 0, %s106
    %s128 = sphi 0, %s130
    %s131 = sphi 0, %s128
    %s132 = sphi 0, %s131
    %s148 = sphi 0, %s132
    %s154 = sphi 0, %s156
    %s157 = sphi 0, %s154
    %s158 = sphi 0, %s157
    %s174 = sphi 0, %s158
    %s180 = sphi 0, %s182
    %s183 = sphi 0, %s180
    %s184 = sphi 0, %s183
    %s200 = sphi 0, %s184
    %s206 = sphi 0, %s208
    %s209 = sphi 0, %s206
    %s210 = sphi 0, %s209
    %s226 = sphi 0, %s210
    %s232 = sphi 0, %s234
    %s235 = sphi 0, %s232
    %s236 = sphi 0, %s235
    %s252 = sphi 0, %s236
    %s258 = sphi 0, %s260
    %s261 = sphi 0, %s258
    %s262 = sphi 0, %s261
    %s278 = sphi 0, %s262
    %s284 = sphi 0, %s286
    %s287 = sphi 0, %s284
    %s288 = sphi 0, %s287
    %s304 = sphi 0, %s288
    %s310 = sphi 0, %s312
    %s313 = sphi 0, %s310
    %s314 = sphi 0, %s313
    %s330 = sphi 0, %s314
    %s336 = sphi 0, %s338
    %s339 = sphi 0, %s336
    %s340 = sphi 0, %s339
    %s356 = sphi 0, %s340
    %s360 = sphi 0, %s360
    %s362 = sphi 0, %s360
    %s363 = sphi 0, %s362
    %s377 = sphi 0, %s363
  $region4: #{rgat_forward.1} parent=0 // loop_header_branch
    %22 = sbr.rel (%p20) target = $region8
  $region5: #{rgat_forward.1} parent=0 // loop_body
    %s24 = ssub.s32 %s19, 1
    %s25 = ssub.s32 %s19, 2
    %s26 = sadd.s32 %s19, 1
    %s28 = sadd.s32 %s27, 1
    %p31 = scmp.eq.s32.totalorder %s19, 1
    %p32 = scmp.ne.s32.totalorder %s27, %s29
    %p33 = scmp.eq.s32.totalorder %s19, 0
    %p34 = por %p32, %p33
    %p35 = scmp.ne.s32.totalorder %s27, %s29
    %p36 = scmp.eq.s32.totalorder %s24, 1
    %p37 = por %p35, %p36
    %p38 = scmp.ne.s32.totalorder %s29, %s30
    %p39 = scmp.eq.s32.totalorder %s24, 0
    %p40 = por %p38, %p39
    %p41 = scmp.ne.s32.totalorder %s29, %s30
    %p42 = scmp.eq.s32.totalorder %s25, 1
    %p43 = por %p41, %p42
    %p45 = scmp.ne.s32.totalorder %s30, %s44
    %p46 = scmp.eq.s32.totalorder %s25, 0
    %p47 = por %p45, %p46
    %s48 = ssub.s32 %s19, %s26
    %p49 = scmp.eq.s32.totalorder %s48, 0
    %s51 = sadd.s32 %s50, 1
    %s52 = scalar_select %p49, %s50, %s51
    %p55 = pneg %p49
    %p56 = scmp.eq.s32.totalorder %s19, 1
    %p57 = por %p55, %p56
    %p58 = scmp.ne.s32.totalorder %s50, %s53
    %p59 = scmp.eq.s32.totalorder %s19, 0
    %p60 = por %p58, %p59
    %p61 = scmp.ne.s32.totalorder %s50, %s53
    %p62 = scmp.eq.s32.totalorder %s24, 1
    %p63 = por %p61, %p62
    %p64 = scmp.ne.s32.totalorder %s53, %s54
    %p65 = scmp.eq.s32.totalorder %s24, 0
    %p66 = por %p64, %p65
    %p67 = scmp.ne.s32.totalorder %s53, %s54
    %p68 = scmp.eq.s32.totalorder %s25, 1
    %p69 = por %p67, %p68
    %p71 = scmp.ne.s32.totalorder %s54, %s70
    %p72 = scmp.eq.s32.totalorder %s25, 0
    %p73 = por %p71, %p72
    %s74 = ssub.s32 %s19, %s26
    %p75 = scmp.eq.s32.totalorder %s74, 0
    %s77 = sadd.s32 %s76, 1
    %s78 = scalar_select %p75, %s76, %s77
    %p81 = pneg %p75
    %p82 = scmp.eq.s32.totalorder %s19, 1
    %p83 = por %p81, %p82
    %p84 = scmp.ne.s32.totalorder %s76, %s79
    %p85 = scmp.eq.s32.totalorder %s19, 0
    %p86 = por %p84, %p85
    %p87 = scmp.ne.s32.totalorder %s76, %s79
    %p88 = scmp.eq.s32.totalorder %s24, 1
    %p89 = por %p87, %p88
    %p90 = scmp.ne.s32.totalorder %s79, %s80
    %p91 = scmp.eq.s32.totalorder %s24, 0
    %p92 = por %p90, %p91
    %p93 = scmp.ne.s32.totalorder %s79, %s80
    %p94 = scmp.eq.s32.totalorder %s25, 1
    %p95 = por %p93, %p94
    %p97 = scmp.ne.s32.totalorder %s80, %s96
    %p98 = scmp.eq.s32.totalorder %s25, 0
    %p99 = por %p97, %p98
    %s100 = ssub.s32 %s19, %s26
    %p101 = scmp.eq.s32.totalorder %s100, 0
    %s103 = sadd.s32 %s102, 1
    %s104 = scalar_select %p101, %s102, %s103
    %p107 = pneg %p101
    %p108 = scmp.eq.s32.totalorder %s19, 1
    %p109 = por %p107, %p108
    %p110 = scmp.ne.s32.totalorder %s102, %s105
    %p111 = scmp.eq.s32.totalorder %s19, 0
    %p112 = por %p110, %p111
    %p113 = scmp.ne.s32.totalorder %s102, %s105
    %p114 = scmp.eq.s32.totalorder %s24, 1
    %p115 = por %p113, %p114
    %p116 = scmp.ne.s32.totalorder %s105, %s106
    %p117 = scmp.eq.s32.totalorder %s24, 0
    %p118 = por %p116, %p117
    %p119 = scmp.ne.s32.totalorder %s105, %s106
    %p120 = scmp.eq.s32.totalorder %s25, 1
    %p121 = por %p119, %p120
    %p123 = scmp.ne.s32.totalorder %s106, %s122
    %p124 = scmp.eq.s32.totalorder %s25, 0
    %p125 = por %p123, %p124
    %s126 = ssub.s32 %s19, %s26
    %p127 = scmp.eq.s32.totalorder %s126, 0
    %s129 = sadd.s32 %s128, 1
    %s130 = scalar_select %p127, %s128, %s129
    %p133 = pneg %p127
    %p134 = scmp.eq.s32.totalorder %s19, 1
    %p135 = por %p133, %p134
    %p136 = scmp.ne.s32.totalorder %s128, %s131
    %p137 = scmp.eq.s32.totalorder %s19, 0
    %p138 = por %p136, %p137
    %p139 = scmp.ne.s32.totalorder %s128, %s131
    %p140 = scmp.eq.s32.totalorder %s24, 1
    %p141 = por %p139, %p140
    %p142 = scmp.ne.s32.totalorder %s131, %s132
    %p143 = scmp.eq.s32.totalorder %s24, 0
    %p144 = por %p142, %p143
    %p145 = scmp.ne.s32.totalorder %s131, %s132
    %p146 = scmp.eq.s32.totalorder %s25, 1
    %p147 = por %p145, %p146
    %p149 = scmp.ne.s32.totalorder %s132, %s148
    %p150 = scmp.eq.s32.totalorder %s25, 0
    %p151 = por %p149, %p150
    %s152 = ssub.s32 %s19, %s26
    %p153 = scmp.eq.s32.totalorder %s152, 0
    %s155 = sadd.s32 %s154, 1
    %s156 = scalar_select %p153, %s154, %s155
    %p159 = pneg %p153
    %p160 = scmp.eq.s32.totalorder %s19, 1
    %p161 = por %p159, %p160
    %p162 = scmp.ne.s32.totalorder %s154, %s157
    %p163 = scmp.eq.s32.totalorder %s19, 0
    %p164 = por %p162, %p163
    %p165 = scmp.ne.s32.totalorder %s154, %s157
    %p166 = scmp.eq.s32.totalorder %s24, 1
    %p167 = por %p165, %p166
    %p168 = scmp.ne.s32.totalorder %s157, %s158
    %p169 = scmp.eq.s32.totalorder %s24, 0
    %p170 = por %p168, %p169
    %p171 = scmp.ne.s32.totalorder %s157, %s158
    %p172 = scmp.eq.s32.totalorder %s25, 1
    %p173 = por %p171, %p172
    %p175 = scmp.ne.s32.totalorder %s158, %s174
    %p176 = scmp.eq.s32.totalorder %s25, 0
    %p177 = por %p175, %p176
    %s178 = ssub.s32 %s19, %s26
    %p179 = scmp.eq.s32.totalorder %s178, 0
    %s181 = sadd.s32 %s180, 1
    %s182 = scalar_select %p179, %s180, %s181
    %p185 = pneg %p179
    %p186 = scmp.eq.s32.totalorder %s19, 1
    %p187 = por %p185, %p186
    %p188 = scmp.ne.s32.totalorder %s180, %s183
    %p189 = scmp.eq.s32.totalorder %s19, 0
    %p190 = por %p188, %p189
    %p191 = scmp.ne.s32.totalorder %s180, %s183
    %p192 = scmp.eq.s32.totalorder %s24, 1
    %p193 = por %p191, %p192
    %p194 = scmp.ne.s32.totalorder %s183, %s184
    %p195 = scmp.eq.s32.totalorder %s24, 0
    %p196 = por %p194, %p195
    %p197 = scmp.ne.s32.totalorder %s183, %s184
    %p198 = scmp.eq.s32.totalorder %s25, 1
    %p199 = por %p197, %p198
    %p201 = scmp.ne.s32.totalorder %s184, %s200
    %p202 = scmp.eq.s32.totalorder %s25, 0
    %p203 = por %p201, %p202
    %s204 = ssub.s32 %s19, %s26
    %p205 = scmp.eq.s32.totalorder %s204, 0
    %s207 = sadd.s32 %s206, 1
    %s208 = scalar_select %p205, %s206, %s207
    %p211 = pneg %p205
    %p212 = scmp.eq.s32.totalorder %s19, 1
    %p213 = por %p211, %p212
    %p214 = scmp.ne.s32.totalorder %s206, %s209
    %p215 = scmp.eq.s32.totalorder %s19, 0
    %p216 = por %p214, %p215
    %p217 = scmp.ne.s32.totalorder %s206, %s209
    %p218 = scmp.eq.s32.totalorder %s24, 1
    %p219 = por %p217, %p218
    %p220 = scmp.ne.s32.totalorder %s209, %s210
    %p221 = scmp.eq.s32.totalorder %s24, 0
    %p222 = por %p220, %p221
    %p223 = scmp.ne.s32.totalorder %s209, %s210
    %p224 = scmp.eq.s32.totalorder %s25, 1
    %p225 = por %p223, %p224
    %p227 = scmp.ne.s32.totalorder %s210, %s226
    %p228 = scmp.eq.s32.totalorder %s25, 0
    %p229 = por %p227, %p228
    %s230 = ssub.s32 %s19, %s26
    %p231 = scmp.eq.s32.totalorder %s230, 0
    %s233 = sadd.s32 %s232, 1
    %s234 = scalar_select %p231, %s232, %s233
    %p237 = pneg %p231
    %p238 = scmp.eq.s32.totalorder %s19, 1
    %p239 = por %p237, %p238
    %p240 = scmp.ne.s32.totalorder %s232, %s235
    %p241 = scmp.eq.s32.totalorder %s19, 0
    %p242 = por %p240, %p241
    %p243 = scmp.ne.s32.totalorder %s232, %s235
    %p244 = scmp.eq.s32.totalorder %s24, 1
    %p245 = por %p243, %p244
    %p246 = scmp.ne.s32.totalorder %s235, %s236
    %p247 = scmp.eq.s32.totalorder %s24, 0
    %p248 = por %p246, %p247
    %p249 = scmp.ne.s32.totalorder %s235, %s236
    %p250 = scmp.eq.s32.totalorder %s25, 1
    %p251 = por %p249, %p250
    %p253 = scmp.ne.s32.totalorder %s236, %s252
    %p254 = scmp.eq.s32.totalorder %s25, 0
    %p255 = por %p253, %p254
    %s256 = ssub.s32 %s19, %s26
    %p257 = scmp.eq.s32.totalorder %s256, 0
    %s259 = sadd.s32 %s258, 1
    %s260 = scalar_select %p257, %s258, %s259
    %p263 = pneg %p257
    %p264 = scmp.eq.s32.totalorder %s19, 1
    %p265 = por %p263, %p264
    %p266 = scmp.ne.s32.totalorder %s258, %s261
    %p267 = scmp.eq.s32.totalorder %s19, 0
    %p268 = por %p266, %p267
    %p269 = scmp.ne.s32.totalorder %s258, %s261
    %p270 = scmp.eq.s32.totalorder %s24, 1
    %p271 = por %p269, %p270
    %p272 = scmp.ne.s32.totalorder %s261, %s262
    %p273 = scmp.eq.s32.totalorder %s24, 0
    %p274 = por %p272, %p273
    %p275 = scmp.ne.s32.totalorder %s261, %s262
    %p276 = scmp.eq.s32.totalorder %s25, 1
    %p277 = por %p275, %p276
    %p279 = scmp.ne.s32.totalorder %s262, %s278
    %p280 = scmp.eq.s32.totalorder %s25, 0
    %p281 = por %p279, %p280
    %s282 = ssub.s32 %s19, %s26
    %p283 = scmp.eq.s32.totalorder %s282, 0
    %s285 = sadd.s32 %s284, 1
    %s286 = scalar_select %p283, %s284, %s285
    %p289 = pneg %p283
    %p290 = scmp.eq.s32.totalorder %s19, 1
    %p291 = por %p289, %p290
    %p292 = scmp.ne.s32.totalorder %s284, %s287
    %p293 = scmp.eq.s32.totalorder %s19, 0
    %p294 = por %p292, %p293
    %p295 = scmp.ne.s32.totalorder %s284, %s287
    %p296 = scmp.eq.s32.totalorder %s24, 1
    %p297 = por %p295, %p296
    %p298 = scmp.ne.s32.totalorder %s287, %s288
    %p299 = scmp.eq.s32.totalorder %s24, 0
    %p300 = por %p298, %p299
    %p301 = scmp.ne.s32.totalorder %s287, %s288
    %p302 = scmp.eq.s32.totalorder %s25, 1
    %p303 = por %p301, %p302
    %p305 = scmp.ne.s32.totalorder %s288, %s304
    %p306 = scmp.eq.s32.totalorder %s25, 0
    %p307 = por %p305, %p306
    %s308 = ssub.s32 %s19, %s26
    %p309 = scmp.eq.s32.totalorder %s308, 0
    %s311 = sadd.s32 %s310, 1
    %s312 = scalar_select %p309, %s310, %s311
    %p315 = pneg %p309
    %p316 = scmp.eq.s32.totalorder %s19, 1
    %p317 = por %p315, %p316
    %p318 = scmp.ne.s32.totalorder %s310, %s313
    %p319 = scmp.eq.s32.totalorder %s19, 0
    %p320 = por %p318, %p319
    %p321 = scmp.ne.s32.totalorder %s310, %s313
    %p322 = scmp.eq.s32.totalorder %s24, 1
    %p323 = por %p321, %p322
    %p324 = scmp.ne.s32.totalorder %s313, %s314
    %p325 = scmp.eq.s32.totalorder %s24, 0
    %p326 = por %p324, %p325
    %p327 = scmp.ne.s32.totalorder %s313, %s314
    %p328 = scmp.eq.s32.totalorder %s25, 1
    %p329 = por %p327, %p328
    %p331 = scmp.ne.s32.totalorder %s314, %s330
    %p332 = scmp.eq.s32.totalorder %s25, 0
    %p333 = por %p331, %p332
    %s334 = ssub.s32 %s19, %s26
    %p335 = scmp.eq.s32.totalorder %s334, 0
    %s337 = sadd.s32 %s336, 1
    %s338 = scalar_select %p335, %s336, %s337
    %p341 = pneg %p335
    %p342 = scmp.eq.s32.totalorder %s19, 1
    %p343 = por %p341, %p342
    %p344 = scmp.ne.s32.totalorder %s336, %s339
    %p345 = scmp.eq.s32.totalorder %s19, 0
    %p346 = por %p344, %p345
    %p347 = scmp.ne.s32.totalorder %s336, %s339
    %p348 = scmp.eq.s32.totalorder %s24, 1
    %p349 = por %p347, %p348
    %p350 = scmp.ne.s32.totalorder %s339, %s340
    %p351 = scmp.eq.s32.totalorder %s24, 0
    %p352 = por %p350, %p351
    %p353 = scmp.ne.s32.totalorder %s339, %s340
    %p354 = scmp.eq.s32.totalorder %s25, 1
    %p355 = por %p353, %p354
    %p357 = scmp.ne.s32.totalorder %s340, %s356
    %p358 = scmp.eq.s32.totalorder %s25, 0
    %p359 = por %p357, %p358
    %s361 = sadd.s32 %s360, 1
    %p364 = scmp.eq.s32.totalorder %s19, 1
    %p365 = scmp.ne.s32.totalorder %s360, %s362
    %p366 = scmp.eq.s32.totalorder %s19, 0
    %p367 = por %p365, %p366
    %p368 = scmp.ne.s32.totalorder %s360, %s362
    %p369 = scmp.eq.s32.totalorder %s24, 1
    %p370 = por %p368, %p369
    %p371 = scmp.ne.s32.totalorder %s362, %s363
    %p372 = scmp.eq.s32.totalorder %s24, 0
    %p373 = por %p371, %p372
    %p374 = scmp.ne.s32.totalorder %s362, %s363
    %p375 = scmp.eq.s32.totalorder %s25, 1
    %p376 = por %p374, %p375
    %p378 = scmp.ne.s32.totalorder %s363, %s377
    %p379 = scmp.eq.s32.totalorder %s25, 0
    %p380 = por %p378, %p379
    %p381 = scmp.le.s32.totalorder 1, %s19
    %p382 = scmp.lt.s32.totalorder %s19, 3
    %p383 = pnand %p381, %p382
    %p384 = pneg %p383
    // Predicated region
    $region9: #{rgat_forward.1} parent=5 // pred_check
      _
    $region10: #{rgat_forward.1} parent=5 // pred_check_branch
      %386 = sbr.rel (%p383) target = $region12
    $region11: #{rgat_forward.1} parent=5 // pred_region
      %s387 = ssub.s32 %s19, 1
      // Predicated region
      $region13: #{rgat_forward.1} parent=11 // pred_check
        %p388 = pneg %p40
      $region14: #{rgat_forward.1} parent=11 // pred_check_branch
        %390 = sbr.rel (%p388) target = $region16
      $region15: #{rgat_forward.1} parent=11 // pred_region
        _
      $region16: #{rgat_forward.1} parent=11 // pred_fallthru
        _
    $region12: #{rgat_forward.1} parent=5 // pred_fallthru
      _
    %p391 = scmp.lt.s32.totalorder %s19, 2
    // Predicated region
    $region17: #{rgat_forward.1} parent=5 // pred_check
      %p392 = pneg %p391
    $region18: #{rgat_forward.1} parent=5 // pred_check_branch
      %394 = sbr.rel (%p392) target = $region20
    $region19: #{rgat_forward.1} parent=5 // pred_region
      // Predicated region
      $region21: #{rgat_forward.1} parent=19 // pred_check
        %p395 = pneg %p60
      $region22: #{rgat_forward.1} parent=19 // pred_check_branch
        %397 = sbr.rel (%p395) target = $region24
      $region23: #{rgat_forward.1} parent=19 // pred_region
        %p398 = scmp.lt.s32.totalorder %s19, 1
        %s399 = scalar_select %p398, %s19, 1
        %s400 = smul.addr %s399, 4
        %s401 = smul.addr %s400, 4
        %s402 = scalar_lea.vmem %s1, %s401
      $region24: #{rgat_forward.1} parent=19 // pred_fallthru
        _
      // Predicated region
      $region25: #{rgat_forward.1} parent=19 // pred_check
        %p403 = pneg %p86
      $region26: #{rgat_forward.1} parent=19 // pred_check_branch
        %405 = sbr.rel (%p403) target = $region28
      $region27: #{rgat_forward.1} parent=19 // pred_region
        %p406 = scmp.lt.s32.totalorder %s19, 1
        %s407 = scalar_select %p406, %s19, 1
        %s408 = smul.addr %s407, 4
        %s409 = smul.addr %s408, 4
        %s410 = scalar_lea.vmem %s2, %s409
      $region28: #{rgat_forward.1} parent=19 // pred_fallthru
        _
      // Predicated region
      $region29: #{rgat_forward.1} parent=19 // pred_check
        %p411 = pneg %p112
      $region30: #{rgat_forward.1} parent=19 // pred_check_branch
        %413 = sbr.rel (%p411) target = $region32
      $region31: #{rgat_forward.1} parent=19 // pred_region
        %p414 = scmp.lt.s32.totalorder %s19, 1
        %s415 = scalar_select %p414, %s19, 1
        %s416 = smul.addr %s415, 4
        %s417 = smul.addr %s416, 4
        %s418 = scalar_lea.vmem %s3, %s417
      $region32: #{rgat_forward.1} parent=19 // pred_fallthru
        _
      // Predicated region
      $region33: #{rgat_forward.1} parent=19 // pred_check
        %p419 = pneg %p138
      $region34: #{rgat_forward.1} parent=19 // pred_check_branch
        %421 = sbr.rel (%p419) target = $region36
      $region35: #{rgat_forward.1} parent=19 // pred_region
        %p422 = scmp.lt.s32.totalorder %s19, 1
        %s423 = scalar_select %p422, %s19, 1
        %s424 = smul.addr %s423, 4
        %s425 = smul.addr %s424, 4
        %s426 = scalar_lea.vmem %s4, %s425
      $region36: #{rgat_forward.1} parent=19 // pred_fallthru
        _
      // Predicated region
      $region37: #{rgat_forward.1} parent=19 // pred_check
        %p427 = pneg %p164
      $region38: #{rgat_forward.1} parent=19 // pred_check_branch
        %429 = sbr.rel (%p427) target = $region40
      $region39: #{rgat_forward.1} parent=19 // pred_region
        %p430 = scmp.lt.s32.totalorder %s19, 1
        %s431 = scalar_select %p430, %s19, 1
        %s432 = scalar_lea.vmem %s5, %s431
      $region40: #{rgat_forward.1} parent=19 // pred_fallthru
        _
      // Predicated region
      $region41: #{rgat_forward.1} parent=19 // pred_check
        %p433 = pneg %p190
      $region42: #{rgat_forward.1} parent=19 // pred_check_branch
        %435 = sbr.rel (%p433) target = $region44
      $region43: #{rgat_forward.1} parent=19 // pred_region
        %p436 = scmp.lt.s32.totalorder %s19, 1
        %s437 = scalar_select %p436, %s19, 1
        %s438 = smul.addr %s437, 4
        %s439 = smul.addr %s438, 4
        %s440 = scalar_lea.vmem %s6, %s439
      $region44: #{rgat_forward.1} parent=19 // pred_fallthru
        _
      // Predicated region
      $region45: #{rgat_forward.1} parent=19 // pred_check
        %p441 = pneg %p216
      $region46: #{rgat_forward.1} parent=19 // pred_check_branch
        %443 = sbr.rel (%p441) target = $region48
      $region47: #{rgat_forward.1} parent=19 // pred_region
        %p444 = scmp.lt.s32.totalorder %s19, 1
        %s445 = scalar_select %p444, %s19, 1
        %s446 = smul.addr %s445, 4
        %s447 = smul.addr %s446, 4
        %s448 = scalar_lea.vmem %s7, %s447
      $region48: #{rgat_forward.1} parent=19 // pred_fallthru
        _
      // Predicated region
      $region49: #{rgat_forward.1} parent=19 // pred_check
        %p449 = pneg %p242
      $region50: #{rgat_forward.1} parent=19 // pred_check_branch
        %451 = sbr.rel (%p449) target = $region52
      $region51: #{rgat_forward.1} parent=19 // pred_region
        %p452 = scmp.lt.s32.totalorder %s19, 1
        %s453 = scalar_select %p452, %s19, 1
        %s454 = scalar_lea.vmem %s8, %s453
      $region52: #{rgat_forward.1} parent=19 // pred_fallthru
        _
      // Predicated region
      $region53: #{rgat_forward.1} parent=19 // pred_check
        %p455 = pneg %p268
      $region54: #{rgat_forward.1} parent=19 // pred_check_branch
        %457 = sbr.rel (%p455) target = $region56
      $region55: #{rgat_forward.1} parent=19 // pred_region
        %p458 = scmp.lt.s32.totalorder %s19, 1
        %s459 = scalar_select %p458, %s19, 1
        %s460 = scalar_lea.vmem %s9, %s459
      $region56: #{rgat_forward.1} parent=19 // pred_fallthru
        _
      // Predicated region
      $region57: #{rgat_forward.1} parent=19 // pred_check
        %p461 = pneg %p294
      $region58: #{rgat_forward.1} parent=19 // pred_check_branch
        %463 = sbr.rel (%p461) target = $region60
      $region59: #{rgat_forward.1} parent=19 // pred_region
        %p464 = scmp.lt.s32.totalorder %s19, 1
        %s465 = scalar_select %p464, %s19, 1
        %s466 = scalar_lea.vmem %s10, %s465
      $region60: #{rgat_forward.1} parent=19 // pred_fallthru
        _
      // Predicated region
      $region61: #{rgat_forward.1} parent=19 // pred_check
        %p467 = pneg %p320
      $region62: #{rgat_forward.1} parent=19 // pred_check_branch
        %469 = sbr.rel (%p467) target = $region64
      $region63: #{rgat_forward.1} parent=19 // pred_region
        %p470 = scmp.lt.s32.totalorder %s19, 1
        %s471 = scalar_select %p470, %s19, 1
        %s472 = smul.addr %s471, 8
        %s473 = smul.addr %s472, 4
        %s474 = scalar_lea.vmem %s11, %s473
      $region64: #{rgat_forward.1} parent=19 // pred_fallthru
        _
      // Predicated region
      $region65: #{rgat_forward.1} parent=19 // pred_check
        %p475 = pneg %p346
      $region66: #{rgat_forward.1} parent=19 // pred_check_branch
        %477 = sbr.rel (%p475) target = $region68
      $region67: #{rgat_forward.1} parent=19 // pred_region
        %p478 = scmp.lt.s32.totalorder %s19, 1
        %s479 = scalar_select %p478, %s19, 1
        %s480 = scalar_lea.vmem %s12, %s479
      $region68: #{rgat_forward.1} parent=19 // pred_fallthru
        _
    $region20: #{rgat_forward.1} parent=5 // pred_fallthru
      _
    %p481 = scmp.le.s32.totalorder 1, %s19
    %p482 = scmp.lt.s32.totalorder %s19, 3
    %p483 = pnand %p481, %p482
    %p484 = pneg %p483
    // Predicated region
    $region69: #{rgat_forward.1} parent=5 // pred_check
      _
    $region70: #{rgat_forward.1} parent=5 // pred_check_branch
      %486 = sbr.rel (%p483) target = $region72
    $region71: #{rgat_forward.1} parent=5 // pred_region
      %s487 = ssub.s32 %s19, 1
      %p488 = pneg %p40
      %p489 = pneg %p37
      %p490 = scmp.lt.s32.totalorder %s24, 1
      %s491 = scalar_select %p490, %s24, 1
      %s492 = smul.addr %s491, 4
      %s493 = smul.addr %s492, 4
      %s494 = scalar_lea.vmem %s1, %s493
      %p495 = pneg %p66
      %p496 = pneg %p63
      %p497 = scmp.lt.s32.totalorder %s24, 1
      %s498 = scalar_select %p497, %s24, 1
      %s499 = smul.addr %s498, 4
      %s500 = smul.addr %s499, 4
      %s501 = scalar_lea.vmem %s2, %s500
      %p502 = pneg %p92
      %p503 = pneg %p89
      %p504 = scmp.lt.s32.totalorder %s24, 1
      %s505 = scalar_select %p504, %s24, 1
      %s506 = smul.addr %s505, 4
      %s507 = smul.addr %s506, 4
      %s508 = scalar_lea.vmem %s3, %s507
      %p509 = pneg %p118
      %p510 = pneg %p115
      %p511 = scmp.lt.s32.totalorder %s24, 1
      %s512 = scalar_select %p511, %s24, 1
      %s513 = smul.addr %s512, 4
      %s514 = smul.addr %s513, 4
      %s515 = scalar_lea.vmem %s4, %s514
      %p516 = pneg %p144
      %p517 = pneg %p141
      %p518 = scmp.lt.s32.totalorder %s24, 1
      %s519 = scalar_select %p518, %s24, 1
      %s520 = scalar_lea.vmem %s5, %s519
      %p521 = pneg %p170
      %p522 = pneg %p167
      %p523 = scmp.lt.s32.totalorder %s24, 1
      %s524 = scalar_select %p523, %s24, 1
      %s525 = smul.addr %s524, 4
      %s526 = smul.addr %s525, 4
      %s527 = scalar_lea.vmem %s6, %s526
      %p528 = pneg %p196
      %p529 = pneg %p193
      %p530 = scmp.lt.s32.totalorder %s24, 1
      %s531 = scalar_select %p530, %s24, 1
      %s532 = smul.addr %s531, 4
      %s533 = smul.addr %s532, 4
      %s534 = scalar_lea.vmem %s7, %s533
      %p535 = pneg %p222
      %p536 = pneg %p219
      %p537 = scmp.lt.s32.totalorder %s24, 1
      %s538 = scalar_select %p537, %s24, 1
      %s539 = scalar_lea.vmem %s8, %s538
      %p540 = pneg %p248
      %p541 = pneg %p245
      %p542 = scmp.lt.s32.totalorder %s24, 1
      %s543 = scalar_select %p542, %s24, 1
      %s544 = scalar_lea.vmem %s9, %s543
      %p545 = pneg %p274
      %p546 = pneg %p271
      %p547 = scmp.lt.s32.totalorder %s24, 1
      %s548 = scalar_select %p547, %s24, 1
      %s549 = scalar_lea.vmem %s10, %s548
      %p550 = pneg %p300
      %p551 = pneg %p297
      %p552 = scmp.lt.s32.totalorder %s24, 1
      %s553 = scalar_select %p552, %s24, 1
      %s554 = smul.addr %s553, 8
      %s555 = smul.addr %s554, 4
      %s556 = scalar_lea.vmem %s11, %s555
      %p557 = pneg %p326
      %p558 = pneg %p323
      %p559 = scmp.lt.s32.totalorder %s24, 1
      %s560 = scalar_select %p559, %s24, 1
      %s561 = scalar_lea.vmem %s12, %s560
      %p562 = pneg %p352
      %p563 = pneg %p349
      %p564 = pneg %p373
      %p565 = pneg %p370
      %p566 = scmp.lt.s32.totalorder %s24, 1
      %s567 = scalar_select %p566, %s24, 1
      %s568 = smul.addr %s567, 4
      %s569 = smul.addr %s568, 4
      %s570 = scalar_lea.vmem %s1, %s569
      %p571 = scmp.lt.s32.totalorder %s24, 1
      %s572 = scalar_select %p571, %s24, 1
      %s573 = smul.addr %s572, 4
      %s574 = smul.addr %s573, 4
      %s575 = scalar_lea.vmem %s2, %s574
      %p576 = scmp.lt.s32.totalorder %s24, 1
      %s577 = scalar_select %p576, %s24, 1
      %s578 = smul.addr %s577, 4
      %s579 = smul.addr %s578, 4
      %s580 = scalar_lea.vmem %s3, %s579
      %p581 = scmp.lt.s32.totalorder %s24, 1
      %s582 = scalar_select %p581, %s24, 1
      %s583 = smul.addr %s582, 4
      %s584 = smul.addr %s583, 4
      %s585 = scalar_lea.vmem %s4, %s584
      %p586 = scmp.lt.s32.totalorder %s24, 1
      %s587 = scalar_select %p586, %s24, 1
      %s588 = scalar_lea.vmem %s5, %s587
      %p589 = scmp.lt.s32.totalorder %s24, 1
      %s590 = scalar_select %p589, %s24, 1
      %s591 = smul.addr %s590, 4
      %s592 = smul.addr %s591, 4
      %s593 = scalar_lea.vmem %s6, %s592
      %p594 = scmp.lt.s32.totalorder %s24, 1
      %s595 = scalar_select %p594, %s24, 1
      %s596 = smul.addr %s595, 4
      %s597 = smul.addr %s596, 4
      %s598 = scalar_lea.vmem %s7, %s597
      %p599 = scmp.lt.s32.totalorder %s24, 1
      %s600 = scalar_select %p599, %s24, 1
      %s601 = scalar_lea.vmem %s8, %s600
      %p602 = scmp.lt.s32.totalorder %s24, 1
      %s603 = scalar_select %p602, %s24, 1
      %s604 = scalar_lea.vmem %s9, %s603
      %p605 = scmp.lt.s32.totalorder %s24, 1
      %s606 = scalar_select %p605, %s24, 1
      %s607 = scalar_lea.vmem %s10, %s606
      %p608 = scmp.lt.s32.totalorder %s24, 1
      %s609 = scalar_select %p608, %s24, 1
      %s610 = smul.addr %s609, 8
      %s611 = smul.addr %s610, 4
      %s612 = scalar_lea.vmem %s11, %s611
      %p613 = scmp.lt.s32.totalorder %s24, 1
      %s614 = scalar_select %p613, %s24, 1
      %s615 = scalar_lea.vmem %s12, %s614
      %p617 = scmp.eq.s32.totalorder %s24, 0
      // Predicated region
      $region73: #{rgat_forward.1} parent=71 // pred_check
        %p618 = pneg %p617
      $region74: #{rgat_forward.1} parent=71 // pred_check_branch
        %620 = sbr.rel (%p618) target = $region76
      $region75: #{rgat_forward.1} parent=71 // pred_region
        %v621 = vld [vmem:[%s0] sm:$0xff]
        %v622 = vld [vmem:[%s0 + $0x8] sm:$0xff]
        %v623 = vld [vmem:[%s0 + $0x10] sm:$0xff]
        %v624 = vld [vmem:[%s0 + $0x18] sm:$0xff]
        %vm625 = vcmask 261120
        %626 = vst.msk [vmem:[#allocation2] sm:$0xff] %vm625, %v621
        %627 = vst.msk [vmem:[#allocation2 + $0x8] sm:$0xff] %vm625, %v622
        %628 = vst.msk [vmem:[#allocation2 + $0x10] sm:$0xff] %vm625, %v623
        %629 = vst.msk [vmem:[#allocation2 + $0x18] sm:$0xff] %vm625, %v624
      $region76: #{rgat_forward.1} parent=71 // pred_fallthru
        _
      %v630 = vld [vmem:[#allocation2] sm:$0xff]
      %v631 = vld [vmem:[#allocation2 + $0x8] sm:$0xff]
      %v632 = vld [vmem:[#allocation2 + $0x10] sm:$0xff]
      %v633 = vld [vmem:[#allocation2 + $0x18] sm:$0xff]
      %v634 = vpack.c.bf16 %v631, %v630
      %v635 = vpack.c.bf16 %v633, %v632
      %v636 = vld [vmem:[%s570] sm:$0xf]
      %v637 = vld [vmem:[%s570 + $0x4] sm:$0xf]
      %v638 = vld [vmem:[%s570 + $0x8] sm:$0xf]
      %v639 = vld [vmem:[%s570 + $0xc] sm:$0xf]
      %v644 = vunpack.c.l.b16 %v636
      %v645 = vunpack.c.l.b16 %v637
      %v646 = vunpack.c.l.b16 %v638
      %v647 = vunpack.c.l.b16 %v639
      %v648 = vpack.c.b16 %v645, %v644
      %v649 = vpack.c.b16 %v647, %v646
      %vm652 = vcmask 261120
      %v654 = vsel %vm652, %v634, 0
      %v657 = vsel %vm652, %v635, 0
      %659 = vmatprep.subr.bf16.mxu0 0
      %660 = vmatpush1.bf16.msra.mxu0 %v648
      %661 = vmatprep.subr.bf16.mxu0 0
      %662 = vmatpush1.bf16.msra.mxu0 %v649
      %663 = vmatprep.subr.bf16.mxu0 0
      %664 = vmatpush1.bf16.msra.mxu0 0
      %665 = vmatprep.subr.bf16.mxu0 0
      %666 = vmatpush1.bf16.msra.mxu0 0
      %667 = vmatprep.subr.bf16.mxu0 0
      %668 = vmatpush1.bf16.msra.mxu0 0
      %669 = vmatprep.subr.bf16.mxu0 0
      %670 = vmatpush1.bf16.msra.mxu0 0
      %671 = vmatprep.subr.bf16.mxu0 0
      %672 = vmatpush1.bf16.msra.mxu0 0
      %673 = vmatprep.subr.bf16.mxu0 0
      %674 = vmatpush1.bf16.msra.mxu0 0
      %675 = vmatprep.subr.bf16.mxu0 0
      %676 = vmatpush1.bf16.msra.mxu0 0
      %677 = vmatprep.subr.bf16.mxu0 0
      %678 = vmatpush1.bf16.msra.mxu0 0
      %679 = vmatprep.subr.bf16.mxu0 0
      %680 = vmatpush1.bf16.msra.mxu0 0
      %681 = vmatprep.subr.bf16.mxu0 0
      %682 = vmatpush1.bf16.msra.mxu0 0
      %683 = vmatprep.subr.bf16.mxu0 0
      %684 = vmatpush1.bf16.msra.mxu0 0
      %685 = vmatprep.subr.bf16.mxu0 0
      %686 = vmatpush1.bf16.msra.mxu0 0
      %687 = vmatprep.subr.bf16.mxu0 0
      %688 = vmatpush1.bf16.msra.mxu0 0
      %689 = vmatprep.subr.bf16.mxu0 0
      %690 = vmatpush1.bf16.msra.mxu0 0
      %691 = vmatprep.mubr.bf16.mxu0 0
      %692 = vmatmul.mubr.bf16.gmra.mrb[0].mxu0 %v654
      %v693 = vpop.f32.mrb[0].mxu0
      %v694 = vadd.f32 0.0, %v693
      %v695 = vpop.f32.mrb[0].mxu0
      %v696 = vpop.f32.mrb[0].mxu0
      %v697 = vadd.f32 0.0, %v696
      %v698 = vpop.f32.mrb[0].mxu0
      %699 = vmatprep.mubr.bf16.mxu0 0
      %700 = vmatmul.mubr.bf16.gmra.mrb[0].mxu0 %v657
      %v701 = vpop.f32.mrb[0].mxu0
      %v702 = vadd.f32 0.0, %v701
      %v703 = vpop.f32.mrb[0].mxu0
      %v704 = vpop.f32.mrb[0].mxu0
      %v705 = vadd.f32 0.0, %v704
      %v706 = vpop.f32.mrb[0].mxu0
      %707 = vdwg.mxu0
      %v708 = vld [vmem:[%s575] sm:$0xf]
      %v709 = vld [vmem:[%s575 + $0x4] sm:$0xf]
      %v710 = vld [vmem:[%s575 + $0x8] sm:$0xf]
      %v711 = vld [vmem:[%s575 + $0xc] sm:$0xf]
      %v716 = vunpack.c.l.b16 %v708
      %v717 = vunpack.c.l.b16 %v709
      %v718 = vunpack.c.l.b16 %v710
      %v719 = vunpack.c.l.b16 %v711
      %v720 = vpack.c.b16 %v717, %v716
      %v721 = vpack.c.b16 %v719, %v718
      %724 = vmatprep.subr.bf16.mxu0 0
      %725 = vmatpush1.bf16.msra.mxu0 %v720
      %726 = vmatprep.subr.bf16.mxu0 0
      %727 = vmatpush1.bf16.msra.mxu0 %v721
      %728 = vmatprep.subr.bf16.mxu0 0
      %729 = vmatpush1.bf16.msra.mxu0 0
      %730 = vmatprep.subr.bf16.mxu0 0
      %731 = vmatpush1.bf16.msra.mxu0 0
      %732 = vmatprep.subr.bf16.mxu0 0
      %733 = vmatpush1.bf16.msra.mxu0 0
      %734 = vmatprep.subr.bf16.mxu0 0
      %735 = vmatpush1.bf16.msra.mxu0 0
      %736 = vmatprep.subr.bf16.mxu0 0
      %737 = vmatpush1.bf16.msra.mxu0 0
      %738 = vmatprep.subr.bf16.mxu0 0
      %739 = vmatpush1.bf16.msra.mxu0 0
      %740 = vmatprep.subr.bf16.mxu0 0
      %741 = vmatpush1.bf16.msra.mxu0 0
      %742 = vmatprep.subr.bf16.mxu0 0
      %743 = vmatpush1.bf16.msra.mxu0 0
      %744 = vmatprep.subr.bf16.mxu0 0
      %745 = vmatpush1.bf16.msra.mxu0 0
      %746 = vmatprep.subr.bf16.mxu0 0
      %747 = vmatpush1.bf16.msra.mxu0 0
      %748 = vmatprep.subr.bf16.mxu0 0
      %749 = vmatpush1.bf16.msra.mxu0 0
      %750 = vmatprep.subr.bf16.mxu0 0
      %751 = vmatpush1.bf16.msra.mxu0 0
      %752 = vmatprep.subr.bf16.mxu0 0
      %753 = vmatpush1.bf16.msra.mxu0 0
      %754 = vmatprep.subr.bf16.mxu0 0
      %755 = vmatpush1.bf16.msra.mxu0 0
      %756 = vmatprep.mubr.bf16.mxu0 0
      %757 = vmatmul.mubr.bf16.gmra.mrb[0].mxu0 %v654
      %v758 = vpop.f32.mrb[0].mxu0
      %v759 = vadd.f32 0.0, %v758
      %v760 = vpop.f32.mrb[0].mxu0
      %v761 = vpop.f32.mrb[0].mxu0
      %v762 = vadd.f32 0.0, %v761
      %v763 = vpop.f32.mrb[0].mxu0
      %764 = vmatprep.mubr.bf16.mxu0 0
      %765 = vmatmul.mubr.bf16.gmra.mrb[0].mxu0 %v657
      %v766 = vpop.f32.mrb[0].mxu0
      %v767 = vadd.f32 0.0, %v766
      %v768 = vpop.f32.mrb[0].mxu0
      %v769 = vpop.f32.mrb[0].mxu0
      %v770 = vadd.f32 0.0, %v769
      %v771 = vpop.f32.mrb[0].mxu0
      %772 = vdwg.mxu0
      %v773 = vpack.c.bf16 %v697, %v694
      %v774 = vpack.c.bf16 %v705, %v702
      %v775 = vpack.c.bf16 %v762, %v759
      %v776 = vpack.c.bf16 %v770, %v767
      %v777 = vld [vmem:[%s580] sm:$0xf]
      %v778 = vld [vmem:[%s580 + $0x4] sm:$0xf]
      %v779 = vld [vmem:[%s580 + $0x8] sm:$0xf]
      %v780 = vld [vmem:[%s580 + $0xc] sm:$0xf]
      %v785 = vunpack.c.l.b16 %v777
      %v786 = vunpack.c.l.b16 %v778
      %v787 = vunpack.c.l.b16 %v779
      %v788 = vunpack.c.l.b16 %v780
      %v789 = vpack.c.b16 %v786, %v785
      %v790 = vpack.c.b16 %v788, %v787
      %v794 = vsel %vm652, %v773, 0
      %v797 = vsel %vm652, %v774, 0
      %799 = vmatprep.subr.bf16.mxu0 0
      %800 = vmatpush1.bf16.msra.mxu0 %v789
      %801 = vmatprep.subr.bf16.mxu0 0
      %802 = vmatpush1.bf16.msra.mxu0 %v790
      %803 = vmatprep.subr.bf16.mxu0 0
      %804 = vmatpush1.bf16.msra.mxu0 0
      %805 = vmatprep.subr.bf16.mxu0 0
      %806 = vmatpush1.bf16.msra.mxu0 0
      %807 = vmatprep.subr.bf16.mxu0 0
      %808 = vmatpush1.bf16.msra.mxu0 0
      %809 = vmatprep.subr.bf16.mxu0 0
      %810 = vmatpush1.bf16.msra.mxu0 0
      %811 = vmatprep.subr.bf16.mxu0 0
      %812 = vmatpush1.bf16.msra.mxu0 0
      %813 = vmatprep.subr.bf16.mxu0 0
      %814 = vmatpush1.bf16.msra.mxu0 0
      %815 = vmatprep.subr.bf16.mxu0 0
      %816 = vmatpush1.bf16.msra.mxu0 0
      %817 = vmatprep.subr.bf16.mxu0 0
      %818 = vmatpush1.bf16.msra.mxu0 0
      %819 = vmatprep.subr.bf16.mxu0 0
      %820 = vmatpush1.bf16.msra.mxu0 0
      %821 = vmatprep.subr.bf16.mxu0 0
      %822 = vmatpush1.bf16.msra.mxu0 0
      %823 = vmatprep.subr.bf16.mxu0 0
      %824 = vmatpush1.bf16.msra.mxu0 0
      %825 = vmatprep.subr.bf16.mxu0 0
      %826 = vmatpush1.bf16.msra.mxu0 0
      %827 = vmatprep.subr.bf16.mxu0 0
      %828 = vmatpush1.bf16.msra.mxu0 0
      %829 = vmatprep.subr.bf16.mxu0 0
      %830 = vmatpush1.bf16.msra.mxu0 0
      %831 = vmatprep.mubr.bf16.mxu0 0
      %832 = vmatmul.mubr.bf16.gmra.mrb[0].mxu0 %v794
      %v833 = vpop.f32.mrb[0].mxu0
      %v834 = vadd.f32 0.0, %v833
      %v835 = vpop.f32.mrb[0].mxu0
      %v836 = vpop.f32.mrb[0].mxu0
      %v837 = vadd.f32 0.0, %v836
      %v838 = vpop.f32.mrb[0].mxu0
      %839 = vmatprep.mubr.bf16.mxu0 0
      %840 = vmatmul.mubr.bf16.gmra.mrb[0].mxu0 %v797
      %v841 = vpop.f32.mrb[0].mxu0
      %v842 = vadd.f32 0.0, %v841
      %v843 = vpop.f32.mrb[0].mxu0
      %v844 = vpop.f32.mrb[0].mxu0
      %v845 = vadd.f32 0.0, %v844
      %v846 = vpop.f32.mrb[0].mxu0
      %847 = vdwg.mxu0
      %v849 = vsel %vm652, %v775, 0
      %v852 = vsel %vm652, %v776, 0
      %854 = vmatprep.subr.bf16.mxu0 0
      %855 = vmatpush1.bf16.msra.mxu0 %v789
      %856 = vmatprep.subr.bf16.mxu0 0
      %857 = vmatpush1.bf16.msra.mxu0 %v790
      %858 = vmatprep.subr.bf16.mxu0 0
      %859 = vmatpush1.bf16.msra.mxu0 0
      %860 = vmatprep.subr.bf16.mxu0 0
      %861 = vmatpush1.bf16.msra.mxu0 0
      %862 = vmatprep.subr.bf16.mxu0 0
      %863 = vmatpush1.bf16.msra.mxu0 0
      %864 = vmatprep.subr.bf16.mxu0 0
      %865 = vmatpush1.bf16.msra.mxu0 0
      %866 = vmatprep.subr.bf16.mxu0 0
      %867 = vmatpush1.bf16.msra.mxu0 0
      %868 = vmatprep.subr.bf16.mxu0 0
      %869 = vmatpush1.bf16.msra.mxu0 0
      %870 = vmatprep.subr.bf16.mxu0 0
      %871 = vmatpush1.bf16.msra.mxu0 0
      %872 = vmatprep.subr.bf16.mxu0 0
      %873 = vmatpush1.bf16.msra.mxu0 0
      %874 = vmatprep.subr.bf16.mxu0 0
      %875 = vmatpush1.bf16.msra.mxu0 0
      %876 = vmatprep.subr.bf16.mxu0 0
      %877 = vmatpush1.bf16.msra.mxu0 0
      %878 = vmatprep.subr.bf16.mxu0 0
      %879 = vmatpush1.bf16.msra.mxu0 0
      %880 = vmatprep.subr.bf16.mxu0 0
      %881 = vmatpush1.bf16.msra.mxu0 0
      %882 = vmatprep.subr.bf16.mxu0 0
      %883 = vmatpush1.bf16.msra.mxu0 0
      %884 = vmatprep.subr.bf16.mxu0 0
      %885 = vmatpush1.bf16.msra.mxu0 0
      %886 = vmatprep.mubr.bf16.mxu0 0
      %887 = vmatmul.mubr.bf16.gmra.mrb[0].mxu0 %v849
      %v888 = vpop.f32.mrb[0].mxu0
      %v889 = vadd.f32 0.0, %v888
      %v890 = vpop.f32.mrb[0].mxu0
      %v891 = vpop.f32.mrb[0].mxu0
      %v892 = vadd.f32 0.0, %v891
      %v893 = vpop.f32.mrb[0].mxu0
      %894 = vmatprep.mubr.bf16.mxu0 0
      %895 = vmatmul.mubr.bf16.gmra.mrb[0].mxu0 %v852
      %v896 = vpop.f32.mrb[0].mxu0
      %v897 = vadd.f32 0.0, %v896
      %v898 = vpop.f32.mrb[0].mxu0
      %v899 = vpop.f32.mrb[0].mxu0
      %v900 = vadd.f32 0.0, %v899
      %v901 = vpop.f32.mrb[0].mxu0
      %902 = vdwg.mxu0
      %v903 = vld [vmem:[%s585] sm:$0xf]
      %v904 = vld [vmem:[%s585 + $0x4] sm:$0xf]
      %v905 = vld [vmem:[%s585 + $0x8] sm:$0xf]
      %v906 = vld [vmem:[%s585 + $0xc] sm:$0xf]
      %v911 = vunpack.c.l.b16 %v903
      %v912 = vunpack.c.l.b16 %v904
      %v913 = vunpack.c.l.b16 %v905
      %v914 = vunpack.c.l.b16 %v906
      %v915 = vpack.c.b16 %v912, %v911
      %v916 = vpack.c.b16 %v914, %v913
      %919 = vmatprep.subr.bf16.mxu0 0
      %920 = vmatpush1.bf16.msra.mxu0 %v915
      %921 = vmatprep.subr.bf16.mxu0 0
      %922 = vmatpush1.bf16.msra.mxu0 %v916
      %923 = vmatprep.subr.bf16.mxu0 0
      %924 = vmatpush1.bf16.msra.mxu0 0
      %925 = vmatprep.subr.bf16.mxu0 0
      %926 = vmatpush1.bf16.msra.mxu0 0
      %927 = vmatprep.subr.bf16.mxu0 0
      %928 = vmatpush1.bf16.msra.mxu0 0
      %929 = vmatprep.subr.bf16.mxu0 0
      %930 = vmatpush1.bf16.msra.mxu0 0
      %931 = vmatprep.subr.bf16.mxu0 0
      %932 = vmatpush1.bf16.msra.mxu0 0
      %933 = vmatprep.subr.bf16.mxu0 0
      %934 = vmatpush1.bf16.msra.mxu0 0
      %935 = vmatprep.subr.bf16.mxu0 0
      %936 = vmatpush1.bf16.msra.mxu0 0
      %937 = vmatprep.subr.bf16.mxu0 0
      %938 = vmatpush1.bf16.msra.mxu0 0
      %939 = vmatprep.subr.bf16.mxu0 0
      %940 = vmatpush1.bf16.msra.mxu0 0
      %941 = vmatprep.subr.bf16.mxu0 0
      %942 = vmatpush1.bf16.msra.mxu0 0
      %943 = vmatprep.subr.bf16.mxu0 0
      %944 = vmatpush1.bf16.msra.mxu0 0
      %945 = vmatprep.subr.bf16.mxu0 0
      %946 = vmatpush1.bf16.msra.mxu0 0
      %947 = vmatprep.subr.bf16.mxu0 0
      %948 = vmatpush1.bf16.msra.mxu0 0
      %949 = vmatprep.subr.bf16.mxu0 0
      %950 = vmatpush1.bf16.msra.mxu0 0
      %951 = vmatprep.mubr.bf16.mxu0 0
      %952 = vmatmul.mubr.bf16.gmra.mrb[0].mxu0 %v794
      %v953 = vpop.f32.mrb[0].mxu0
      %v954 = vadd.f32 0.0, %v953
      %v955 = vpop.f32.mrb[0].mxu0
      %v956 = vpop.f32.mrb[0].mxu0
      %v957 = vadd.f32 0.0, %v956
      %v958 = vpop.f32.mrb[0].mxu0
      %959 = vmatprep.mubr.bf16.mxu0 0
      %960 = vmatmul.mubr.bf16.gmra.mrb[0].mxu0 %v797
      %v961 = vpop.f32.mrb[0].mxu0
      %v962 = vadd.f32 0.0, %v961
      %v963 = vpop.f32.mrb[0].mxu0
      %v964 = vpop.f32.mrb[0].mxu0
      %v965 = vadd.f32 0.0, %v964
      %v966 = vpop.f32.mrb[0].mxu0
      %967 = vdwg.mxu0
      %968 = vxpose.xlu0.b32.start [1/16] %v954, 128
      %969 = vxpose.xlu0.b32.cont [2/16] %v957, 128
      %970 = vxpose.xlu0.b32.cont [3/16] %v962, 128
      %971 = vxpose.xlu0.b32.cont [4/16] %v965, 128
      %972 = vxpose.xlu0.b32.cont [5/16] 0.0, 128
      %973 = vxpose.xlu0.b32.cont [6/16] 0.0, 128
      %974 = vxpose.xlu0.b32.cont [7/16] 0.0, 128
      %975 = vxpose.xlu0.b32.cont [8/16] 0.0, 128
      %976 = vxpose.xlu0.b32.cont [9/16] 0.0, 128
      %977 = vxpose.xlu0.b32.cont [10/16] 0.0, 128
      %978 = vxpose.xlu0.b32.cont [11/16] 0.0, 128
      %979 = vxpose.xlu0.b32.cont [12/16] 0.0, 128
      %980 = vxpose.xlu0.b32.cont [13/16] 0.0, 128
      %981 = vxpose.xlu0.b32.cont [14/16] 0.0, 128
      %982 = vxpose.xlu0.b32.cont [15/16] 0.0, 128
      %983 = vxpose.xlu0.b32.end [16/16] 0.0, 128
      %v984 = vpop.trf.xlu0
      %v985 = vpop.trf.xlu0
      %v986 = vpop.trf.xlu0
      %v987 = vpop.trf.xlu0
      %v988 = vpop.trf.xlu0
      %v989 = vpop.trf.xlu0
      %v990 = vpop.trf.xlu0
      %v991 = vpop.trf.xlu0
      %v992 = vpop.trf.xlu0
      %v993 = vpop.trf.xlu0
      %v994 = vpop.trf.xlu0
      %v995 = vpop.trf.xlu0
      %v996 = vpop.trf.xlu0
      %v997 = vpop.trf.xlu0
      %v998 = vpop.trf.xlu0
      %v999 = vpop.trf.xlu0
      %1000 = vmatprep.subr.bf16.mxu0 0
      %1001 = vmatpush1.bf16.msra.mxu0 %v915
      %1002 = vmatprep.subr.bf16.mxu0 0
      %1003 = vmatpush1.bf16.msra.mxu0 %v916
      %1004 = vmatprep.subr.bf16.mxu0 0
      %1005 = vmatpush1.bf16.msra.mxu0 0
      %1006 = vmatprep.subr.bf16.mxu0 0
      %1007 = vmatpush1.bf16.msra.mxu0 0
      %1008 = vmatprep.subr.bf16.mxu0 0
      %1009 = vmatpush1.bf16.msra.mxu0 0
      %1010 = vmatprep.subr.bf16.mxu0 0
      %1011 = vmatpush1.bf16.msra.mxu0 0
      %1012 = vmatprep.subr.bf16.mxu0 0
      %1013 = vmatpush1.bf16.msra.mxu0 0
      %1014 = vmatprep.subr.bf16.mxu0 0
      %1015 = vmatpush1.bf16.msra.mxu0 0
      %1016 = vmatprep.subr.bf16.mxu0 0
      %1017 = vmatpush1.bf16.msra.mxu0 0
      %1018 = vmatprep.subr.bf16.mxu0 0
      %1019 = vmatpush1.bf16.msra.mxu0 0
      %1020 = vmatprep.subr.bf16.mxu0 0
      %1021 = vmatpush1.bf16.msra.mxu0 0
      %1022 = vmatprep.subr.bf16.mxu0 0
      %1023 = vmatpush1.bf16.msra.mxu0 0
      %1024 = vmatprep.subr.bf16.mxu0 0
      %1025 = vmatpush1.bf16.msra.mxu0 0
      %1026 = vmatprep.subr.bf16.mxu0 0
      %1027 = vmatpush1.bf16.msra.mxu0 0
      %1028 = vmatprep.subr.bf16.mxu0 0
      %1029 = vmatpush1.bf16.msra.mxu0 0
      %1030 = vmatprep.subr.bf16.mxu0 0
      %1031 = vmatpush1.bf16.msra.mxu0 0
      %1032 = vmatprep.mubr.bf16.mxu0 0
      %1033 = vmatmul.mubr.bf16.gmra.mrb[0].mxu0 %v849
      %v1034 = vpop.f32.mrb[0].mxu0
      %v1035 = vadd.f32 0.0, %v1034
      %v1036 = vpop.f32.mrb[0].mxu0
      %v1037 = vpop.f32.mrb[0].mxu0
      %v1038 = vadd.f32 0.0, %v1037
      %v1039 = vpop.f32.mrb[0].mxu0
      %1040 = vmatprep.mubr.bf16.mxu0 0
      %1041 = vmatmul.mubr.bf16.gmra.mrb[0].mxu0 %v852
      %v1042 = vpop.f32.mrb[0].mxu0
      %v1043 = vadd.f32 0.0, %v1042
      %v1044 = vpop.f32.mrb[0].mxu0
      %v1045 = vpop.f32.mrb[0].mxu0
      %v1046 = vadd.f32 0.0, %v1045
      %v1047 = vpop.f32.mrb[0].mxu0
      %1048 = vdwg.mxu0
      %1049 = vxpose.xlu0.b32.start [1/16] %v1035, 128
      %1050 = vxpose.xlu0.b32.cont [2/16] %v1038, 128
      %1051 = vxpose.xlu0.b32.cont [3/16] %v1043, 128
      %1052 = vxpose.xlu0.b32.cont [4/16] %v1046, 128
      %1053 = vxpose.xlu0.b32.cont [5/16] 0.0, 128
      %1054 = vxpose.xlu0.b32.cont [6/16] 0.0, 128
      %1055 = vxpose.xlu0.b32.cont [7/16] 0.0, 128
      %1056 = vxpose.xlu0.b32.cont [8/16] 0.0, 128
      %1057 = vxpose.xlu0.b32.cont [9/16] 0.0, 128
      %1058 = vxpose.xlu0.b32.cont [10/16] 0.0, 128
      %1059 = vxpose.xlu0.b32.cont [11/16] 0.0, 128
      %1060 = vxpose.xlu0.b32.cont [12/16] 0.0, 128
      %1061 = vxpose.xlu0.b32.cont [13/16] 0.0, 128
      %1062 = vxpose.xlu0.b32.cont [14/16] 0.0, 128
      %1063 = vxpose.xlu0.b32.cont [15/16] 0.0, 128
      %1064 = vxpose.xlu0.b32.end [16/16] 0.0, 128
      %v1065 = vpop.trf.xlu0
      %v1066 = vpop.trf.xlu0
      %v1067 = vpop.trf.xlu0
      %v1068 = vpop.trf.xlu0
      %v1069 = vpop.trf.xlu0
      %v1070 = vpop.trf.xlu0
      %v1071 = vpop.trf.xlu0
      %v1072 = vpop.trf.xlu0
      %v1073 = vpop.trf.xlu0
      %v1074 = vpop.trf.xlu0
      %v1075 = vpop.trf.xlu0
      %v1076 = vpop.trf.xlu0
      %v1077 = vpop.trf.xlu0
      %v1078 = vpop.trf.xlu0
      %v1079 = vpop.trf.xlu0
      %v1080 = vpop.trf.xlu0
      %v1081 = vlaneseq
      %v1082 = vshrl.u32 %v1081, 7
      %v1083 = vlaneseq
      %v1084 = vand.u32 %v1083, 127
      %vm1085 = vcmp.eq.s32.totalorder %v1082, %v1084
      %1087 = vset.pattern.permute.xlu0 0
      %1088 = vperm.xlu0 %1087, %v834
      %v1089 = vpop.permute.xlu0 %1088
      %v1091 = vlaneseq
      %v1092 = vshrl.u32 %v1091, 7
      %v1093 = vsub.s32 0, %v1092
      %v1094 = vrot.slane %v984, %v1093
      %v1095 = vadd.f32 %v1089, %v1094
      %vm1096 = vcmp.ge.f32.partialorder %v1095, 0.0
      %v1097 = vmul.f32 %v1095, 0.2
      %v1098 = vsel %vm1096, %v1095, %v1097
      %1100 = vset.pattern.permute.xlu0 0
      %1101 = vperm.xlu0 %1100, %v889
      %v1102 = vpop.permute.xlu0 %1101
      %v1104 = vlaneseq
      %v1105 = vshrl.u32 %v1104, 7
      %v1106 = vsub.s32 0, %v1105
      %v1107 = vrot.slane %v1065, %v1106
      %v1108 = vadd.f32 %v1102, %v1107
      %vm1109 = vcmp.ge.f32.partialorder %v1108, 0.0
      %v1110 = vmul.f32 %v1108, 0.2
      %v1111 = vsel %vm1109, %v1108, %v1110
      %v1112 = vsel %vm1085, -1e+30, %v1098
      %vm1113 = vcmask 64512
      %v1114 = vsel %vm1113, %v1112, -inf
      %1115 = vmax.xlane.f32.xlu0 %v1114
      %v1116 = vpop.xlane.xlu0 %1115
      %vm1117 = vcmask 130112
      %v1118 = vsel %vm1117, %v1111, -inf
      %1119 = vmax.xlane.f32.xlu0 %v1118
      %v1120 = vpop.xlane.xlu0 %1119
      %v1121 = vmax.f32 %v1116, %v1120
      %v1122 = vsub.f32 %v1112, %v1121
      %v1123 = vmul.f32 %v1122, 1.442695
      %v1124 = vpow.pop %v1123
      %v1125 = vsub.f32 %v1111, %v1121
      %v1126 = vmul.f32 %v1125, 1.442695
      %v1127 = vpow.pop %v1126
      %v1128 = vsel %vm1113, %v1124, 0.0
      %1129 = vadd.xlane.f32.xlu0 %v1128
      %v1130 = vpop.xlane.xlu0 %1129
      %1132 = vrot.lane.b32.xlu0 %v1127, 120
      %v1133 = vpop.permute.xlu0 %1132
      %v1135 = vsel %vm1113, %v1133, 0.0
      %1136 = vadd.xlane.f32.xlu0 %v1135
      %v1137 = vpop.xlane.xlu0 %1136
      %v1138 = vadd.f32 %v1130, %v1137
      %v1139 = vrcp.pop %v1138
      %v1140 = vpack.c.bf16 %v1124, %v1124
      %v1141 = vpack.c.bf16 %v1127, %v1127
      %1143 = vrot.lane.b32.xlu0 %v1141, 120
      %v1144 = vpop.permute.xlu0 %1143
      %v1146 = vrot.slane %v775, 4
      %v1148 = vsel %vm1113, %v1144, 0
      %vm1150 = vcmask 1043456
      %v1152 = vsel %vm1150, %v1146, 0
      %1154 = vmatprep.subr.bf16.mxu0 0
      %1155 = vmatpush1.bf16.msra.mxu0 %v1152
      %1156 = vmatprep.subr.bf16.mxu0 0
      %1157 = vmatpush1.bf16.msra.mxu0 0
      %1158 = vmatprep.subr.bf16.mxu0 0
      %1159 = vmatpush1.bf16.msra.mxu0 0
      %1160 = vmatprep.subr.bf16.mxu0 0
      %1161 = vmatpush1.bf16.msra.mxu0 0
      %1162 = vmatprep.subr.bf16.mxu0 0
      %1163 = vmatpush1.bf16.msra.mxu0 0
      %1164 = vmatprep.subr.bf16.mxu0 0
      %1165 = vmatpush1.bf16.msra.mxu0 0
      %1166 = vmatprep.subr.bf16.mxu0 0
      %1167 = vmatpush1.bf16.msra.mxu0 0
      %1168 = vmatprep.subr.bf16.mxu0 0
      %1169 = vmatpush1.bf16.msra.mxu0 0
      %1170 = vmatprep.subr.bf16.mxu0 0
      %1171 = vmatpush1.bf16.msra.mxu0 0
      %1172 = vmatprep.subr.bf16.mxu0 0
      %1173 = vmatpush1.bf16.msra.mxu0 0
      %1174 = vmatprep.subr.bf16.mxu0 0
      %1175 = vmatpush1.bf16.msra.mxu0 0
      %1176 = vmatprep.subr.bf16.mxu0 0
      %1177 = vmatpush1.bf16.msra.mxu0 0
      %1178 = vmatprep.subr.bf16.mxu0 0
      %1179 = vmatpush1.bf16.msra.mxu0 0
      %1180 = vmatprep.subr.bf16.mxu0 0
      %1181 = vmatpush1.bf16.msra.mxu0 0
      %1182 = vmatprep.subr.bf16.mxu0 0
      %1183 = vmatpush1.bf16.msra.mxu0 0
      %1184 = vmatprep.subr.bf16.mxu0 0
      %1185 = vmatpush1.bf16.msra.mxu0 0
      %1186 = vmatprep.mubr.bf16.mxu0 0
      %1187 = vmatmul.mubr.bf16.gmra.mrb[0].mxu0 %v1148
      %v1188 = vpop.f32.mrb[0].mxu0
      %v1189 = vadd.f32 0.0, %v1188
      %v1190 = vpop.f32.mrb[0].mxu0
      %v1191 = vpop.f32.mrb[0].mxu0
      %v1192 = vpop.f32.mrb[0].mxu0
      %1193 = vdwg.mxu0
      %v1195 = vsel %vm1113, %v1140, 0
      %v1197 = vsel %vm1150, %v773, 0
      %1199 = vmatprep.subr.bf16.mxu0 0
      %1200 = vmatpush1.bf16.msra.mxu0 %v1197
      %1201 = vmatprep.subr.bf16.mxu0 0
      %1202 = vmatpush1.bf16.msra.mxu0 0
      %1203 = vmatprep.subr.bf16.mxu0 0
      %1204 = vmatpush1.bf16.msra.mxu0 0
      %1205 = vmatprep.subr.bf16.mxu0 0
      %1206 = vmatpush1.bf16.msra.mxu0 0
      %1207 = vmatprep.subr.bf16.mxu0 0
      %1208 = vmatpush1.bf16.msra.mxu0 0
      %1209 = vmatprep.subr.bf16.mxu0 0
      %1210 = vmatpush1.bf16.msra.mxu0 0
      %1211 = vmatprep.subr.bf16.mxu0 0
      %1212 = vmatpush1.bf16.msra.mxu0 0
      %1213 = vmatprep.subr.bf16.mxu0 0
      %1214 = vmatpush1.bf16.msra.mxu0 0
      %1215 = vmatprep.subr.bf16.mxu0 0
      %1216 = vmatpush1.bf16.msra.mxu0 0
      %1217 = vmatprep.subr.bf16.mxu0 0
      %1218 = vmatpush1.bf16.msra.mxu0 0
      %1219 = vmatprep.subr.bf16.mxu0 0
      %1220 = vmatpush1.bf16.msra.mxu0 0
      %1221 = vmatprep.subr.bf16.mxu0 0
      %1222 = vmatpush1.bf16.msra.mxu0 0
      %1223 = vmatprep.subr.bf16.mxu0 0
      %1224 = vmatpush1.bf16.msra.mxu0 0
      %1225 = vmatprep.subr.bf16.mxu0 0
      %1226 = vmatpush1.bf16.msra.mxu0 0
      %1227 = vmatprep.subr.bf16.mxu0 0
      %1228 = vmatpush1.bf16.msra.mxu0 0
      %1229 = vmatprep.subr.bf16.mxu0 0
      %1230 = vmatpush1.bf16.msra.mxu0 0
      %1231 = vmatprep.mubr.bf16.mxu0 0
      %1232 = vmatmul.mubr.bf16.gmra.mrb[0].mxu0 %v1195
      %v1233 = vpop.f32.mrb[0].mxu0
      %v1234 = vadd.f32 %v1189, %v1233
      %v1235 = vpop.f32.mrb[0].mxu0
      %v1236 = vpop.f32.mrb[0].mxu0
      %v1237 = vpop.f32.mrb[0].mxu0
      %1238 = vdwg.mxu0
      %v1239 = vmul.f32 %v1234, %v1139
      %v1240 = vadd.f32 %v1239, 0.0
      %1242 = vset.pattern.permute.xlu0 0
      %1243 = vperm.xlu0 %1242, %v892
      %v1244 = vpop.permute.xlu0 %1243
      %v1246 = vadd.f32 %v1244, %v1107
      %vm1247 = vcmp.ge.f32.partialorder %v1246, 0.0
      %v1248 = vmul.f32 %v1246, 0.2
      %v1249 = vsel %vm1247, %v1246, %v1248
      %1251 = vset.pattern.permute.xlu0 0
      %1252 = vperm.xlu0 %1251, %v837
      %v1253 = vpop.permute.xlu0 %1252
      %v1255 = vadd.f32 %v1253, %v1094
      %vm1256 = vcmp.ge.f32.partialorder %v1255, 0.0
      %v1257 = vmul.f32 %v1255, 0.2
      %v1258 = vsel %vm1256, %v1255, %v1257
      %1260 = vrot.lane.b32.xlu0 %v1258, 120
      %v1261 = vpop.permute.xlu0 %1260
      %v1263 = vsel %vm1085, -1e+30, %v1261
      %v1264 = vsel %vm1113, %v1249, -inf
      %1265 = vmax.xlane.f32.xlu0 %v1264
      %v1266 = vpop.xlane.xlu0 %1265
      %v1267 = vsel %vm1113, %v1263, -inf
      %1268 = vmax.xlane.f32.xlu0 %v1267
      %v1269 = vpop.xlane.xlu0 %1268
      %v1270 = vmax.f32 %v1266, %v1269
      %v1271 = vsub.f32 %v1249, %v1270
      %v1272 = vmul.f32 %v1271, 1.442695
      %v1273 = vpow.pop %v1272
      %v1274 = vsub.f32 %v1263, %v1270
      %v1275 = vmul.f32 %v1274, 1.442695
      %v1276 = vpow.pop %v1275
      %v1277 = vsel %vm1113, %v1273, 0.0
      %1278 = vadd.xlane.f32.xlu0 %v1277
      %v1279 = vpop.xlane.xlu0 %1278
      %v1280 = vsel %vm1113, %v1276, 0.0
      %1281 = vadd.xlane.f32.xlu0 %v1280
      %v1282 = vpop.xlane.xlu0 %1281
      %v1283 = vadd.f32 %v1279, %v1282
      %v1284 = vrcp.pop %v1283
      %v1285 = vpack.c.bf16 %v1273, %v1273
      %v1286 = vpack.c.bf16 %v1276, %v1276
      %v1288 = vrot.slane %v773, 4
      %v1290 = vsel %vm1113, %v1286, 0
      %v1293 = vsel %vm1150, %v1288, 0
      %1295 = vmatprep.subr.bf16.mxu0 0
      %1296 = vmatpush1.bf16.msra.mxu0 %v1293
      %1297 = vmatprep.subr.bf16.mxu0 0
      %1298 = vmatpush1.bf16.msra.mxu0 0
      %1299 = vmatprep.subr.bf16.mxu0 0
      %1300 = vmatpush1.bf16.msra.mxu0 0
      %1301 = vmatprep.subr.bf16.mxu0 0
      %1302 = vmatpush1.bf16.msra.mxu0 0
      %1303 = vmatprep.subr.bf16.mxu0 0
      %1304 = vmatpush1.bf16.msra.mxu0 0
      %1305 = vmatprep.subr.bf16.mxu0 0
      %1306 = vmatpush1.bf16.msra.mxu0 0
      %1307 = vmatprep.subr.bf16.mxu0 0
      %1308 = vmatpush1.bf16.msra.mxu0 0
      %1309 = vmatprep.subr.bf16.mxu0 0
      %1310 = vmatpush1.bf16.msra.mxu0 0
      %1311 = vmatprep.subr.bf16.mxu0 0
      %1312 = vmatpush1.bf16.msra.mxu0 0
      %1313 = vmatprep.subr.bf16.mxu0 0
      %1314 = vmatpush1.bf16.msra.mxu0 0
      %1315 = vmatprep.subr.bf16.mxu0 0
      %1316 = vmatpush1.bf16.msra.mxu0 0
      %1317 = vmatprep.subr.bf16.mxu0 0
      %1318 = vmatpush1.bf16.msra.mxu0 0
      %1319 = vmatprep.subr.bf16.mxu0 0
      %1320 = vmatpush1.bf16.msra.mxu0 0
      %1321 = vmatprep.subr.bf16.mxu0 0
      %1322 = vmatpush1.bf16.msra.mxu0 0
      %1323 = vmatprep.subr.bf16.mxu0 0
      %1324 = vmatpush1.bf16.msra.mxu0 0
      %1325 = vmatprep.subr.bf16.mxu0 0
      %1326 = vmatpush1.bf16.msra.mxu0 0
      %1327 = vmatprep.mubr.bf16.mxu0 0
      %1328 = vmatmul.mubr.bf16.gmra.mrb[0].mxu0 %v1290
      %v1329 = vpop.f32.mrb[0].mxu0
      %v1330 = vadd.f32 0.0, %v1329
      %v1331 = vpop.f32.mrb[0].mxu0
      %v1332 = vpop.f32.mrb[0].mxu0
      %v1333 = vpop.f32.mrb[0].mxu0
      %1334 = vdwg.mxu0
      %v1336 = vsel %vm1113, %v1285, 0
      %v1338 = vsel %vm1150, %v775, 0
      %1340 = vmatprep.subr.bf16.mxu0 0
      %1341 = vmatpush1.bf16.msra.mxu0 %v1338
      %1342 = vmatprep.subr.bf16.mxu0 0
      %1343 = vmatpush1.bf16.msra.mxu0 0
      %1344 = vmatprep.subr.bf16.mxu0 0
      %1345 = vmatpush1.bf16.msra.mxu0 0
      %1346 = vmatprep.subr.bf16.mxu0 0
      %1347 = vmatpush1.bf16.msra.mxu0 0
      %1348 = vmatprep.subr.bf16.mxu0 0
      %1349 = vmatpush1.bf16.msra.mxu0 0
      %1350 = vmatprep.subr.bf16.mxu0 0
      %1351 = vmatpush1.bf16.msra.mxu0 0
      %1352 = vmatprep.subr.bf16.mxu0 0
      %1353 = vmatpush1.bf16.msra.mxu0 0
      %1354 = vmatprep.subr.bf16.mxu0 0
      %1355 = vmatpush1.bf16.msra.mxu0 0
      %1356 = vmatprep.subr.bf16.mxu0 0
      %1357 = vmatpush1.bf16.msra.mxu0 0
      %1358 = vmatprep.subr.bf16.mxu0 0
      %1359 = vmatpush1.bf16.msra.mxu0 0
      %1360 = vmatprep.subr.bf16.mxu0 0
      %1361 = vmatpush1.bf16.msra.mxu0 0
      %1362 = vmatprep.subr.bf16.mxu0 0
      %1363 = vmatpush1.bf16.msra.mxu0 0
      %1364 = vmatprep.subr.bf16.mxu0 0
      %1365 = vmatpush1.bf16.msra.mxu0 0
      %1366 = vmatprep.subr.bf16.mxu0 0
      %1367 = vmatpush1.bf16.msra.mxu0 0
      %1368 = vmatprep.subr.bf16.mxu0 0
      %1369 = vmatpush1.bf16.msra.mxu0 0
      %1370 = vmatprep.subr.bf16.mxu0 0
      %1371 = vmatpush1.bf16.msra.mxu0 0
      %1372 = vmatprep.mubr.bf16.mxu0 0
      %1373 = vmatmul.mubr.bf16.gmra.mrb[0].mxu0 %v1336
      %v1374 = vpop.f32.mrb[0].mxu0
      %v1375 = vadd.f32 %v1330, %v1374
      %v1376 = vpop.f32.mrb[0].mxu0
      %v1377 = vpop.f32.mrb[0].mxu0
      %v1378 = vpop.f32.mrb[0].mxu0
      %1379 = vdwg.mxu0
      %v1380 = vmul.f32 %v1375, %v1284
      %v1381 = vadd.f32 %v1380, 0.0
      %1383 = vset.pattern.permute.xlu0 0
      %1384 = vperm.xlu0 %1383, %v842
      %v1385 = vpop.permute.xlu0 %1384
      %v1387 = vadd.f32 %v1385, %v1094
      %vm1388 = vcmp.ge.f32.partialorder %v1387, 0.0
      %v1389 = vmul.f32 %v1387, 0.2
      %v1390 = vsel %vm1388, %v1387, %v1389
      %1392 = vset.pattern.permute.xlu0 0
      %1393 = vperm.xlu0 %1392, %v897
      %v1394 = vpop.permute.xlu0 %1393
      %v1396 = vadd.f32 %v1394, %v1107
      %vm1397 = vcmp.ge.f32.partialorder %v1396, 0.0
      %v1398 = vmul.f32 %v1396, 0.2
      %v1399 = vsel %vm1397, %v1396, %v1398
      %1401 = vrot.lane.b32.xlu0 %v1390, 112
      %v1402 = vpop.permute.xlu0 %1401
      %v1404 = vsel %vm1085, -1e+30, %v1402
      %v1405 = vsel %vm1113, %v1404, -inf
      %1406 = vmax.xlane.f32.xlu0 %v1405
      %v1407 = vpop.xlane.xlu0 %1406
      %vm1408 = vcmask 261312
      %v1409 = vsel %vm1408, %v1399, -inf
      %1410 = vmax.xlane.f32.xlu0 %v1409
      %v1411 = vpop.xlane.xlu0 %1410
      %v1412 = vmax.f32 %v1407, %v1411
      %v1413 = vsub.f32 %v1404, %v1412
      %v1414 = vmul.f32 %v1413, 1.442695
      %v1415 = vpow.pop %v1414
      %v1416 = vsub.f32 %v1399, %v1412
      %v1417 = vmul.f32 %v1416, 1.442695
      %v1418 = vpow.pop %v1417
      %v1419 = vsel %vm1113, %v1415, 0.0
      %1420 = vadd.xlane.f32.xlu0 %v1419
      %v1421 = vpop.xlane.xlu0 %1420
      %1423 = vrot.lane.b32.xlu0 %v1418, 104
      %v1424 = vpop.permute.xlu0 %1423
      %v1426 = vsel %vm1113, %v1424, 0.0
      %1427 = vadd.xlane.f32.xlu0 %v1426
      %v1428 = vpop.xlane.xlu0 %1427
      %v1429 = vadd.f32 %v1421, %v1428
      %v1430 = vrcp.pop %v1429
      %v1431 = vpack.c.bf16 %v1415, %v1415
      %v1432 = vpack.c.bf16 %v1418, %v1418
      %1434 = vrot.lane.b32.xlu0 %v1432, 104
      %v1435 = vpop.permute.xlu0 %1434
      %v1437 = vrot.slane %v776, 4
      %v1439 = vsel %vm1113, %v1435, 0
      %v1442 = vsel %vm1150, %v1437, 0
      %1444 = vmatprep.subr.bf16.mxu0 0
      %1445 = vmatpush1.bf16.msra.mxu0 %v1442
      %1446 = vmatprep.subr.bf16.mxu0 0
      %1447 = vmatpush1.bf16.msra.mxu0 0
      %1448 = vmatprep.subr.bf16.mxu0 0
      %1449 = vmatpush1.bf16.msra.mxu0 0
      %1450 = vmatprep.subr.bf16.mxu0 0
      %1451 = vmatpush1.bf16.msra.mxu0 0
      %1452 = vmatprep.subr.bf16.mxu0 0
      %1453 = vmatpush1.bf16.msra.mxu0 0
      %1454 = vmatprep.subr.bf16.mxu0 0
      %1455 = vmatpush1.bf16.msra.mxu0 0
      %1456 = vmatprep.subr.bf16.mxu0 0
      %1457 = vmatpush1.bf16.msra.mxu0 0
      %1458 = vmatprep.subr.bf16.mxu0 0
      %1459 = vmatpush1.bf16.msra.mxu0 0
      %1460 = vmatprep.subr.bf16.mxu0 0
      %1461 = vmatpush1.bf16.msra.mxu0 0
      %1462 = vmatprep.subr.bf16.mxu0 0
      %1463 = vmatpush1.bf16.msra.mxu0 0
      %1464 = vmatprep.subr.bf16.mxu0 0
      %1465 = vmatpush1.bf16.msra.mxu0 0
      %1466 = vmatprep.subr.bf16.mxu0 0
      %1467 = vmatpush1.bf16.msra.mxu0 0
      %1468 = vmatprep.subr.bf16.mxu0 0
      %1469 = vmatpush1.bf16.msra.mxu0 0
      %1470 = vmatprep.subr.bf16.mxu0 0
      %1471 = vmatpush1.bf16.msra.mxu0 0
      %1472 = vmatprep.subr.bf16.mxu0 0
      %1473 = vmatpush1.bf16.msra.mxu0 0
      %1474 = vmatprep.subr.bf16.mxu0 0
      %1475 = vmatpush1.bf16.msra.mxu0 0
      %1476 = vmatprep.mubr.bf16.mxu0 0
      %1477 = vmatmul.mubr.bf16.gmra.mrb[0].mxu0 %v1439
      %v1478 = vpop.f32.mrb[0].mxu0
      %v1479 = vadd.f32 0.0, %v1478
      %v1480 = vpop.f32.mrb[0].mxu0
      %v1481 = vpop.f32.mrb[0].mxu0
      %v1482 = vpop.f32.mrb[0].mxu0
      %1483 = vdwg.mxu0
      %v1485 = vsel %vm1113, %v1431, 0
      %v1487 = vsel %vm1150, %v774, 0
      %1489 = vmatprep.subr.bf16.mxu0 0
      %1490 = vmatpush1.bf16.msra.mxu0 %v1487
      %1491 = vmatprep.subr.bf16.mxu0 0
      %1492 = vmatpush1.bf16.msra.mxu0 0
      %1493 = vmatprep.subr.bf16.mxu0 0
      %1494 = vmatpush1.bf16.msra.mxu0 0
      %1495 = vmatprep.subr.bf16.mxu0 0
      %1496 = vmatpush1.bf16.msra.mxu0 0
      %1497 = vmatprep.subr.bf16.mxu0 0
      %1498 = vmatpush1.bf16.msra.mxu0 0
      %1499 = vmatprep.subr.bf16.mxu0 0
      %1500 = vmatpush1.bf16.msra.mxu0 0
      %1501 = vmatprep.subr.bf16.mxu0 0
      %1502 = vmatpush1.bf16.msra.mxu0 0
      %1503 = vmatprep.subr.bf16.mxu0 0
      %1504 = vmatpush1.bf16.msra.mxu0 0
      %1505 = vmatprep.subr.bf16.mxu0 0
      %1506 = vmatpush1.bf16.msra.mxu0 0
      %1507 = vmatprep.subr.bf16.mxu0 0
      %1508 = vmatpush1.bf16.msra.mxu0 0
      %1509 = vmatprep.subr.bf16.mxu0 0
      %1510 = vmatpush1.bf16.msra.mxu0 0
      %1511 = vmatprep.subr.bf16.mxu0 0
      %1512 = vmatpush1.bf16.msra.mxu0 0
      %1513 = vmatprep.subr.bf16.mxu0 0
      %1514 = vmatpush1.bf16.msra.mxu0 0
      %1515 = vmatprep.subr.bf16.mxu0 0
      %1516 = vmatpush1.bf16.msra.mxu0 0
      %1517 = vmatprep.subr.bf16.mxu0 0
      %1518 = vmatpush1.bf16.msra.mxu0 0
      %1519 = vmatprep.subr.bf16.mxu0 0
      %1520 = vmatpush1.bf16.msra.mxu0 0
      %1521 = vmatprep.mubr.bf16.mxu0 0
      %1522 = vmatmul.mubr.bf16.gmra.mrb[0].mxu0 %v1485
      %v1523 = vpop.f32.mrb[0].mxu0
      %v1524 = vadd.f32 %v1479, %v1523
      %v1525 = vpop.f32.mrb[0].mxu0
      %v1526 = vpop.f32.mrb[0].mxu0
      %v1527 = vpop.f32.mrb[0].mxu0
      %1528 = vdwg.mxu0
      %v1529 = vmul.f32 %v1524, %v1430
      %v1530 = vadd.f32 %v1529, 0.0
      %1532 = vset.pattern.permute.xlu0 0
      %1533 = vperm.xlu0 %1532, %v900
      %v1534 = vpop.permute.xlu0 %1533
      %v1536 = vadd.f32 %v1534, %v1107
      %vm1537 = vcmp.ge.f32.partialorder %v1536, 0.0
      %v1538 = vmul.f32 %v1536, 0.2
      %v1539 = vsel %vm1537, %v1536, %v1538
      %1541 = vset.pattern.permute.xlu0 0
      %1542 = vperm.xlu0 %1541, %v845
      %v1543 = vpop.permute.xlu0 %1542
      %v1545 = vadd.f32 %v1543, %v1094
      %vm1546 = vcmp.ge.f32.partialorder %v1545, 0.0
      %v1547 = vmul.f32 %v1545, 0.2
      %v1548 = vsel %vm1546, %v1545, %v1547
      %1550 = vrot.lane.b32.xlu0 %v1548, 104
      %v1551 = vpop.permute.xlu0 %1550
      %v1553 = vsel %vm1085, -1e+30, %v1551
      %vm1554 = vcmask 195712
      %v1555 = vsel %vm1554, %v1539, -inf
      %1556 = vmax.xlane.f32.xlu0 %v1555
      %v1557 = vpop.xlane.xlu0 %1556
      %v1558 = vsel %vm1113, %v1553, -inf
      %1559 = vmax.xlane.f32.xlu0 %v1558
      %v1560 = vpop.xlane.xlu0 %1559
      %v1561 = vmax.f32 %v1557, %v1560
      %v1562 = vsub.f32 %v1539, %v1561
      %v1563 = vmul.f32 %v1562, 1.442695
      %v1564 = vpow.pop %v1563
      %v1565 = vsub.f32 %v1553, %v1561
      %v1566 = vmul.f32 %v1565, 1.442695
      %v1567 = vpow.pop %v1566
      %1569 = vrot.lane.b32.xlu0 %v1564, 112
      %v1570 = vpop.permute.xlu0 %1569
      %v1572 = vsel %vm1113, %v1570, 0.0
      %1573 = vadd.xlane.f32.xlu0 %v1572
      %v1574 = vpop.xlane.xlu0 %1573
      %v1575 = vsel %vm1113, %v1567, 0.0
      %1576 = vadd.xlane.f32.xlu0 %v1575
      %v1577 = vpop.xlane.xlu0 %1576
      %v1578 = vadd.f32 %v1574, %v1577
      %v1579 = vrcp.pop %v1578
      %v1580 = vpack.c.bf16 %v1564, %v1564
      %v1581 = vpack.c.bf16 %v1567, %v1567
      %v1583 = vrot.slane %v774, 4
      %v1585 = vsel %vm1113, %v1581, 0
      %v1588 = vsel %vm1150, %v1583, 0
      %1590 = vmatprep.subr.bf16.mxu0 0
      %1591 = vmatpush1.bf16.msra.mxu0 %v1588
      %1592 = vmatprep.subr.bf16.mxu0 0
      %1593 = vmatpush1.bf16.msra.mxu0 0
      %1594 = vmatprep.subr.bf16.mxu0 0
      %1595 = vmatpush1.bf16.msra.mxu0 0
      %1596 = vmatprep.subr.bf16.mxu0 0
      %1597 = vmatpush1.bf16.msra.mxu0 0
      %1598 = vmatprep.subr.bf16.mxu0 0
      %1599 = vmatpush1.bf16.msra.mxu0 0
      %1600 = vmatprep.subr.bf16.mxu0 0
      %1601 = vmatpush1.bf16.msra.mxu0 0
      %1602 = vmatprep.subr.bf16.mxu0 0
      %1603 = vmatpush1.bf16.msra.mxu0 0
      %1604 = vmatprep.subr.bf16.mxu0 0
      %1605 = vmatpush1.bf16.msra.mxu0 0
      %1606 = vmatprep.subr.bf16.mxu0 0
      %1607 = vmatpush1.bf16.msra.mxu0 0
      %1608 = vmatprep.subr.bf16.mxu0 0
      %1609 = vmatpush1.bf16.msra.mxu0 0
      %1610 = vmatprep.subr.bf16.mxu0 0
      %1611 = vmatpush1.bf16.msra.mxu0 0
      %1612 = vmatprep.subr.bf16.mxu0 0
      %1613 = vmatpush1.bf16.msra.mxu0 0
      %1614 = vmatprep.subr.bf16.mxu0 0
      %1615 = vmatpush1.bf16.msra.mxu0 0
      %1616 = vmatprep.subr.bf16.mxu0 0
      %1617 = vmatpush1.bf16.msra.mxu0 0
      %1618 = vmatprep.subr.bf16.mxu0 0
      %1619 = vmatpush1.bf16.msra.mxu0 0
      %1620 = vmatprep.subr.bf16.mxu0 0
      %1621 = vmatpush1.bf16.msra.mxu0 0
      %1622 = vmatprep.mubr.bf16.mxu0 0
      %1623 = vmatmul.mubr.bf16.gmra.mrb[0].mxu0 %v1585
      %v1624 = vpop.f32.mrb[0].mxu0
      %v1625 = vadd.f32 0.0, %v1624
      %v1626 = vpop.f32.mrb[0].mxu0
      %v1627 = vpop.f32.mrb[0].mxu0
      %v1628 = vpop.f32.mrb[0].mxu0
      %1629 = vdwg.mxu0
      %1631 = vrot.lane.b32.xlu0 %v1580, 112
      %v1632 = vpop.permute.xlu0 %1631
      %v1634 = vsel %vm1113, %v1632, 0
      %v1636 = vsel %vm1150, %v776, 0
      %1638 = vmatprep.subr.bf16.mxu0 0
      %1639 = vmatpush1.bf16.msra.mxu0 %v1636
      %1640 = vmatprep.subr.bf16.mxu0 0
      %1641 = vmatpush1.bf16.msra.mxu0 0
      %1642 = vmatprep.subr.bf16.mxu0 0
      %1643 = vmatpush1.bf16.msra.mxu0 0
      %1644 = vmatprep.subr.bf16.mxu0 0
      %1645 = vmatpush1.bf16.msra.mxu0 0
      %1646 = vmatprep.subr.bf16.mxu0 0
      %1647 = vmatpush1.bf16.msra.mxu0 0
      %1648 = vmatprep.subr.bf16.mxu0 0
      %1649 = vmatpush1.bf16.msra.mxu0 0
      %1650 = vmatprep.subr.bf16.mxu0 0
      %1651 = vmatpush1.bf16.msra.mxu0 0
      %1652 = vmatprep.subr.bf16.mxu0 0
      %1653 = vmatpush1.bf16.msra.mxu0 0
      %1654 = vmatprep.subr.bf16.mxu0 0
      %1655 = vmatpush1.bf16.msra.mxu0 0
      %1656 = vmatprep.subr.bf16.mxu0 0
      %1657 = vmatpush1.bf16.msra.mxu0 0
      %1658 = vmatprep.subr.bf16.mxu0 0
      %1659 = vmatpush1.bf16.msra.mxu0 0
      %1660 = vmatprep.subr.bf16.mxu0 0
      %1661 = vmatpush1.bf16.msra.mxu0 0
      %1662 = vmatprep.subr.bf16.mxu0 0
      %1663 = vmatpush1.bf16.msra.mxu0 0
      %1664 = vmatprep.subr.bf16.mxu0 0
      %1665 = vmatpush1.bf16.msra.mxu0 0
      %1666 = vmatprep.subr.bf16.mxu0 0
      %1667 = vmatpush1.bf16.msra.mxu0 0
      %1668 = vmatprep.subr.bf16.mxu0 0
      %1669 = vmatpush1.bf16.msra.mxu0 0
      %1670 = vmatprep.mubr.bf16.mxu0 0
      %1671 = vmatmul.mubr.bf16.gmra.mrb[0].mxu0 %v1634
      %v1672 = vpop.f32.mrb[0].mxu0
      %v1673 = vadd.f32 %v1625, %v1672
      %v1674 = vpop.f32.mrb[0].mxu0
      %v1675 = vpop.f32.mrb[0].mxu0
      %v1676 = vpop.f32.mrb[0].mxu0
      %1677 = vdwg.mxu0
      %v1678 = vmul.f32 %v1673, %v1579
      %v1679 = vadd.f32 %v1678, 0.0
      %v1680 = vld [vmem:[%s588] sm:$0x1]
      %v1682 = vlaneseq
      %v1683 = vshrl.u32 %v1682, 7
      %v1684 = vsub.s32 0, %v1683
      %v1685 = vrot.slane %v1680, %v1684
      %v1687 = vadd.f32 %v1240, %v1685
      %v1688 = vadd.f32 %v1381, %v1685
      %v1689 = vadd.f32 %v1530, %v1685
      %v1690 = vadd.f32 %v1679, %v1685
      %v1691 = vpack.c.bf16 %v1688, %v1687
      %v1692 = vpack.c.bf16 %v1690, %v1689
      %v1693 = vld [vmem:[%s593] sm:$0xf]
      %v1694 = vld [vmem:[%s593 + $0x4] sm:$0xf]
      %v1695 = vld [vmem:[%s593 + $0x8] sm:$0xf]
      %v1696 = vld [vmem:[%s593 + $0xc] sm:$0xf]
      %v1697 = vld [vmem:[%s598] sm:$0xf]
      %v1698 = vld [vmem:[%s598 + $0x4] sm:$0xf]
      %v1699 = vld [vmem:[%s598 + $0x8] sm:$0xf]
      %v1700 = vld [vmem:[%s598 + $0xc] sm:$0xf]
      %v1705 = vunpack.c.l.b16 %v1697
      %v1706 = vunpack.c.l.b16 %v1698
      %v1707 = vunpack.c.l.b16 %v1699
      %v1708 = vunpack.c.l.b16 %v1700
      %v1709 = vpack.c.b16 %v1706, %v1705
      %v1710 = vpack.c.b16 %v1708, %v1707
      %v1714 = vsel %vm652, %v1691, 0
      %v1717 = vsel %vm652, %v1692, 0
      %1719 = vmatprep.subr.bf16.mxu0 0
      %1720 = vmatpush1.bf16.msra.mxu0 %v1709
      %1721 = vmatprep.subr.bf16.mxu0 0
      %1722 = vmatpush1.bf16.msra.mxu0 %v1710
      %1723 = vmatprep.subr.bf16.mxu0 0
      %1724 = vmatpush1.bf16.msra.mxu0 0
      %1725 = vmatprep.subr.bf16.mxu0 0
      %1726 = vmatpush1.bf16.msra.mxu0 0
      %1727 = vmatprep.subr.bf16.mxu0 0
      %1728 = vmatpush1.bf16.msra.mxu0 0
      %1729 = vmatprep.subr.bf16.mxu0 0
      %1730 = vmatpush1.bf16.msra.mxu0 0
      %1731 = vmatprep.subr.bf16.mxu0 0
      %1732 = vmatpush1.bf16.msra.mxu0 0
      %1733 = vmatprep.subr.bf16.mxu0 0
      %1734 = vmatpush1.bf16.msra.mxu0 0
      %1735 = vmatprep.subr.bf16.mxu0 0
      %1736 = vmatpush1.bf16.msra.mxu0 0
      %1737 = vmatprep.subr.bf16.mxu0 0
      %1738 = vmatpush1.bf16.msra.mxu0 0
      %1739 = vmatprep.subr.bf16.mxu0 0
      %1740 = vmatpush1.bf16.msra.mxu0 0
      %1741 = vmatprep.subr.bf16.mxu0 0
      %1742 = vmatpush1.bf16.msra.mxu0 0
      %1743 = vmatprep.subr.bf16.mxu0 0
      %1744 = vmatpush1.bf16.msra.mxu0 0
      %1745 = vmatprep.subr.bf16.mxu0 0
      %1746 = vmatpush1.bf16.msra.mxu0 0
      %1747 = vmatprep.subr.bf16.mxu0 0
      %1748 = vmatpush1.bf16.msra.mxu0 0
      %1749 = vmatprep.subr.bf16.mxu0 0
      %1750 = vmatpush1.bf16.msra.mxu0 0
      %1751 = vmatprep.mubr.bf16.mxu0 0
      %1752 = vmatmul.mubr.bf16.gmra.mrb[0].mxu0 %v1714
      %v1753 = vpop.f32.mrb[0].mxu0
      %v1754 = vadd.f32 0.0, %v1753
      %v1755 = vpop.f32.mrb[0].mxu0
      %v1756 = vpop.f32.mrb[0].mxu0
      %v1757 = vadd.f32 0.0, %v1756
      %v1758 = vpop.f32.mrb[0].mxu0
      %1759 = vmatprep.mubr.bf16.mxu0 0
      %1760 = vmatmul.mubr.bf16.gmra.mrb[0].mxu0 %v1717
      %v1761 = vpop.f32.mrb[0].mxu0
      %v1762 = vadd.f32 0.0, %v1761
      %v1763 = vpop.f32.mrb[0].mxu0
      %v1764 = vpop.f32.mrb[0].mxu0
      %v1765 = vadd.f32 0.0, %v1764
      %v1766 = vpop.f32.mrb[0].mxu0
      %1767 = vdwg.mxu0
      %v1772 = vunpack.c.l.b16 %v1693
      %v1773 = vunpack.c.l.b16 %v1694
      %v1774 = vunpack.c.l.b16 %v1695
      %v1775 = vunpack.c.l.b16 %v1696
      %v1776 = vpack.c.b16 %v1773, %v1772
      %v1777 = vpack.c.b16 %v1775, %v1774
      %1780 = vmatprep.subr.bf16.mxu0 0
      %1781 = vmatpush1.bf16.msra.mxu0 %v1776
      %1782 = vmatprep.subr.bf16.mxu0 0
      %1783 = vmatpush1.bf16.msra.mxu0 %v1777
      %1784 = vmatprep.subr.bf16.mxu0 0
      %1785 = vmatpush1.bf16.msra.mxu0 0
      %1786 = vmatprep.subr.bf16.mxu0 0
      %1787 = vmatpush1.bf16.msra.mxu0 0
      %1788 = vmatprep.subr.bf16.mxu0 0
      %1789 = vmatpush1.bf16.msra.mxu0 0
      %1790 = vmatprep.subr.bf16.mxu0 0
      %1791 = vmatpush1.bf16.msra.mxu0 0
      %1792 = vmatprep.subr.bf16.mxu0 0
      %1793 = vmatpush1.bf16.msra.mxu0 0
      %1794 = vmatprep.subr.bf16.mxu0 0
      %1795 = vmatpush1.bf16.msra.mxu0 0
      %1796 = vmatprep.subr.bf16.mxu0 0
      %1797 = vmatpush1.bf16.msra.mxu0 0
      %1798 = vmatprep.subr.bf16.mxu0 0
      %1799 = vmatpush1.bf16.msra.mxu0 0
      %1800 = vmatprep.subr.bf16.mxu0 0
      %1801 = vmatpush1.bf16.msra.mxu0 0
      %1802 = vmatprep.subr.bf16.mxu0 0
      %1803 = vmatpush1.bf16.msra.mxu0 0
      %1804 = vmatprep.subr.bf16.mxu0 0
      %1805 = vmatpush1.bf16.msra.mxu0 0
      %1806 = vmatprep.subr.bf16.mxu0 0
      %1807 = vmatpush1.bf16.msra.mxu0 0
      %1808 = vmatprep.subr.bf16.mxu0 0
      %1809 = vmatpush1.bf16.msra.mxu0 0
      %1810 = vmatprep.subr.bf16.mxu0 0
      %1811 = vmatpush1.bf16.msra.mxu0 0
      %1812 = vmatprep.mubr.bf16.mxu0 0
      %1813 = vmatmul.mubr.bf16.gmra.mrb[0].mxu0 %v654
      %v1814 = vpop.f32.mrb[0].mxu0
      %v1815 = vadd.f32 %v1754, %v1814
      %v1816 = vpop.f32.mrb[0].mxu0
      %v1817 = vpop.f32.mrb[0].mxu0
      %v1818 = vadd.f32 %v1757, %v1817
      %v1819 = vpop.f32.mrb[0].mxu0
      %1820 = vmatprep.mubr.bf16.mxu0 0
      %1821 = vmatmul.mubr.bf16.gmra.mrb[0].mxu0 %v657
      %v1822 = vpop.f32.mrb[0].mxu0
      %v1823 = vadd.f32 %v1762, %v1822
      %v1824 = vpop.f32.mrb[0].mxu0
      %v1825 = vpop.f32.mrb[0].mxu0
      %v1826 = vadd.f32 %v1765, %v1825
      %v1827 = vpop.f32.mrb[0].mxu0
      %1828 = vdwg.mxu0
      %v1829 = vld [vmem:[%s601] sm:$0x1]
      %v1831 = vlaneseq
      %v1832 = vshrl.u32 %v1831, 7
      %v1833 = vsub.s32 0, %v1832
      %v1834 = vrot.slane %v1829, %v1833
      %v1836 = vadd.f32 %v1815, %v1834
      %v1837 = vadd.f32 %v1818, %v1834
      %v1838 = vadd.f32 %v1823, %v1834
      %v1839 = vadd.f32 %v1826, %v1834
      %vm1840 = vcmask 523264
      %v1841 = vsel %vm1840, %v1836, 0.0
      %v1842 = vsel %vm1840, %v1837, 0.0
      %v1843 = vadd.f32 %v1841, %v1842
      %v1844 = vsel %vm1840, %v1838, 0.0
      %v1845 = vadd.f32 %v1843, %v1844
      %v1846 = vsel %vm1840, %v1839, 0.0
      %v1847 = vadd.f32 %v1845, %v1846
      %v1848 = vrot.slane %v1847, 4
      %v1849 = vadd.f32 %v1847, %v1848
      %v1850 = vrot.slane %v1849, 2
      %v1851 = vadd.f32 %v1849, %v1850
      %v1852 = vrot.slane %v1851, 1
      %v1853 = vadd.f32 %v1851, %v1852
      %v1854 = vrcp.pop 32.0
      %v1855 = vmul.f32 %v1853, %v1854
      %v1856 = vsub.f32 %v1836, %v1855
      %v1857 = vsub.f32 %v1837, %v1855
      %v1858 = vsub.f32 %v1838, %v1855
      %v1859 = vsub.f32 %v1839, %v1855
      %v1860 = vmul.f32 %v1856, %v1856
      %v1861 = vmul.f32 %v1857, %v1857
      %v1862 = vmul.f32 %v1858, %v1858
      %v1863 = vmul.f32 %v1859, %v1859
      %v1864 = vsel %vm1840, %v1860, 0.0
      %v1865 = vsel %vm1840, %v1861, 0.0
      %v1866 = vadd.f32 %v1864, %v1865
      %v1867 = vsel %vm1840, %v1862, 0.0
      %v1868 = vadd.f32 %v1866, %v1867
      %v1869 = vsel %vm1840, %v1863, 0.0
      %v1870 = vadd.f32 %v1868, %v1869
      %v1871 = vrot.slane %v1870, 4
      %v1872 = vadd.f32 %v1870, %v1871
      %v1873 = vrot.slane %v1872, 2
      %v1874 = vadd.f32 %v1872, %v1873
      %v1875 = vrot.slane %v1874, 1
      %v1876 = vadd.f32 %v1874, %v1875
      %v1877 = vmul.f32 %v1876, %v1854
      %v1878 = vadd.f32 %v1877, 1e-05
      %v1879 = vrsqrt.pop %v1878
      %v1880 = vmul.f32 %v1856, %v1879
      %v1881 = vmul.f32 %v1857, %v1879
      %v1882 = vmul.f32 %v1858, %v1879
      %v1883 = vmul.f32 %v1859, %v1879
      %v1884 = vld [vmem:[%s604] sm:$0x1]
      %v1886 = vlaneseq
      %v1887 = vshrl.u32 %v1886, 7
      %v1888 = vsub.s32 0, %v1887
      %v1889 = vrot.slane %v1884, %v1888
      %v1891 = vmul.f32 %v1880, %v1889
      %v1892 = vmul.f32 %v1881, %v1889
      %v1893 = vmul.f32 %v1882, %v1889
      %v1894 = vmul.f32 %v1883, %v1889
      %v1895 = vld [vmem:[%s607] sm:$0x1]
      %v1897 = vlaneseq
      %v1898 = vshrl.u32 %v1897, 7
      %v1899 = vsub.s32 0, %v1898
      %v1900 = vrot.slane %v1895, %v1899
      %v1902 = vadd.f32 %v1891, %v1900
      %v1903 = vadd.f32 %v1892, %v1900
      %v1904 = vadd.f32 %v1893, %v1900
      %v1905 = vadd.f32 %v1894, %v1900
      %v1906 = vmax.f32 %v1902, 0.0
      %v1907 = vmax.f32 %v1903, 0.0
      %v1908 = vmax.f32 %v1904, 0.0
      %v1909 = vmax.f32 %v1905, 0.0
      %v1910 = vpack.c.bf16 %v1907, %v1906
      %v1911 = vpack.c.bf16 %v1909, %v1908
      %v1912 = vld [vmem:[%s612] sm:$0xf]
      %v1913 = vld [vmem:[%s612 + $0x4] sm:$0xf]
      %v1914 = vld [vmem:[%s612 + $0x8] sm:$0xf]
      %v1915 = vld [vmem:[%s612 + $0xc] sm:$0xf]
      %v1916 = vld [vmem:[%s612 + $0x10] sm:$0xf]
      %v1917 = vld [vmem:[%s612 + $0x14] sm:$0xf]
      %v1918 = vld [vmem:[%s612 + $0x18] sm:$0xf]
      %v1919 = vld [vmem:[%s612 + $0x1c] sm:$0xf]
      %v1920 = vld [vmem:[%s615] sm:$0x1]
      %v1922 = vlaneseq
      %v1923 = vshrl.u32 %v1922, 7
      %v1924 = vsub.s32 0, %v1923
      %v1925 = vrot.slane %v1920, %v1924
      %v1935 = vunpack.c.l.b16 %v1912
      %v1936 = vunpack.c.l.b16 %v1913
      %v1937 = vunpack.c.l.b16 %v1914
      %v1938 = vunpack.c.l.b16 %v1915
      %v1939 = vunpack.c.l.b16 %v1916
      %v1940 = vunpack.c.l.b16 %v1917
      %v1941 = vunpack.c.l.b16 %v1918
      %v1942 = vunpack.c.l.b16 %v1919
      %v1943 = vpack.c.b16 %v1936, %v1935
      %v1944 = vpack.c.b16 %v1938, %v1937
      %v1945 = vpack.c.b16 %v1940, %v1939
      %v1946 = vpack.c.b16 %v1942, %v1941
      %v1952 = vsel %vm1840, %v1910, 0
      %v1955 = vsel %vm1840, %v1911, 0
      %1957 = vmatprep.subr.bf16.mxu0 0
      %1958 = vmatpush1.bf16.msra.mxu0 %v1943
      %1959 = vmatprep.subr.bf16.mxu0 0
      %1960 = vmatpush1.bf16.msra.mxu0 %v1944
      %1961 = vmatprep.subr.bf16.mxu0 0
      %1962 = vmatpush1.bf16.msra.mxu0 %v1945
      %1963 = vmatprep.subr.bf16.mxu0 0
      %1964 = vmatpush1.bf16.msra.mxu0 %v1946
      %1965 = vmatprep.subr.bf16.mxu0 0
      %1966 = vmatpush1.bf16.msra.mxu0 0
      %1967 = vmatprep.subr.bf16.mxu0 0
      %1968 = vmatpush1.bf16.msra.mxu0 0
      %1969 = vmatprep.subr.bf16.mxu0 0
      %1970 = vmatpush1.bf16.msra.mxu0 0
      %1971 = vmatprep.subr.bf16.mxu0 0
      %1972 = vmatpush1.bf16.msra.mxu0 0
      %1973 = vmatprep.subr.bf16.mxu0 0
      %1974 = vmatpush1.bf16.msra.mxu0 0
      %1975 = vmatprep.subr.bf16.mxu0 0
      %1976 = vmatpush1.bf16.msra.mxu0 0
      %1977 = vmatprep.subr.bf16.mxu0 0
      %1978 = vmatpush1.bf16.msra.mxu0 0
      %1979 = vmatprep.subr.bf16.mxu0 0
      %1980 = vmatpush1.bf16.msra.mxu0 0
      %1981 = vmatprep.subr.bf16.mxu0 0
      %1982 = vmatpush1.bf16.msra.mxu0 0
      %1983 = vmatprep.subr.bf16.mxu0 0
      %1984 = vmatpush1.bf16.msra.mxu0 0
      %1985 = vmatprep.subr.bf16.mxu0 0
      %1986 = vmatpush1.bf16.msra.mxu0 0
      %1987 = vmatprep.subr.bf16.mxu0 0
      %1988 = vmatpush1.bf16.msra.mxu0 0
      %1989 = vmatprep.mubr.bf16.mxu0 0
      %1990 = vmatmul.mubr.bf16.gmra.mrb[0].mxu0 %v1952
      %v1991 = vpop.f32.mrb[0].mxu0
      %v1992 = vadd.f32 %v1925, %v1991
      %v1993 = vpop.f32.mrb[0].mxu0
      %v1994 = vpop.f32.mrb[0].mxu0
      %v1995 = vadd.f32 %v1925, %v1994
      %v1996 = vpop.f32.mrb[0].mxu0
      %1997 = vmatprep.mubr.bf16.mxu0 0
      %1998 = vmatmul.mubr.bf16.gmra.mrb[0].mxu0 %v1955
      %v1999 = vpop.f32.mrb[0].mxu0
      %v2000 = vadd.f32 %v1925, %v1999
      %v2001 = vpop.f32.mrb[0].mxu0
      %v2002 = vpop.f32.mrb[0].mxu0
      %v2003 = vadd.f32 %v1925, %v2002
      %v2004 = vpop.f32.mrb[0].mxu0
      %2005 = vdwg.mxu0
      %v2006 = vadd.f32 %v630, %v1992
      %v2007 = vadd.f32 %v631, %v1995
      %v2008 = vadd.f32 %v632, %v2000
      %v2009 = vadd.f32 %v633, %v2003
      %2010 = vst.msk [vmem:[#allocation2] sm:$0xff] %vm652, %v2006
      %2011 = vst.msk [vmem:[#allocation2 + $0x8] sm:$0xff] %vm652, %v2007
      %2012 = vst.msk [vmem:[#allocation2 + $0x10] sm:$0xff] %vm652, %v2008
      %2013 = vst.msk [vmem:[#allocation2 + $0x18] sm:$0xff] %vm652, %v2009
      %p2014 = scmp.eq.s32.totalorder %s24, 1
      // Predicated region
      $region77: #{rgat_forward.1} parent=71 // pred_check
        %p2015 = pneg %p2014
      $region78: #{rgat_forward.1} parent=71 // pred_check_branch
        %2017 = sbr.rel (%p2015) target = $region80
      $region79: #{rgat_forward.1} parent=71 // pred_region
        %v2018 = vld [vmem:[#allocation2] sm:$0xff]
        %v2019 = vld [vmem:[#allocation2 + $0x8] sm:$0xff]
        %v2020 = vld [vmem:[#allocation2 + $0x10] sm:$0xff]
        %v2021 = vld [vmem:[#allocation2 + $0x18] sm:$0xff]
        %2022 = vst.msk [vmem:[%s13] sm:$0xff] %vm652, %v2018
        %2023 = vst.msk [vmem:[%s13 + $0x8] sm:$0xff] %vm652, %v2019
        %2024 = vst.msk [vmem:[%s13 + $0x10] sm:$0xff] %vm652, %v2020
        %2025 = vst.msk [vmem:[%s13 + $0x18] sm:$0xff] %vm652, %v2021
      $region80: #{rgat_forward.1} parent=71 // pred_fallthru
        _
      // Predicated region
      $region81: #{rgat_forward.1} parent=71 // pred_check
        %p2026 = pneg %p370
      $region82: #{rgat_forward.1} parent=71 // pred_check_branch
        %2028 = sbr.rel (%p2026) target = $region84
      $region83: #{rgat_forward.1} parent=71 // pred_region
        _
      $region84: #{rgat_forward.1} parent=71 // pred_fallthru
        _
      // Predicated region
      $region85: #{rgat_forward.1} parent=71 // pred_check
        %p2029 = pneg %p370
      $region86: #{rgat_forward.1} parent=71 // pred_check_branch
        %2031 = sbr.rel (%p2029) target = $region88
      $region87: #{rgat_forward.1} parent=71 // pred_region
        _
      $region88: #{rgat_forward.1} parent=71 // pred_fallthru
        _
    $region72: #{rgat_forward.1} parent=5 // pred_fallthru
      _
    %p2032 = scmp.le.s32.totalorder 2, %s19
    // Predicated region
    $region89: #{rgat_forward.1} parent=5 // pred_check
      %p2033 = pneg %p2032
    $region90: #{rgat_forward.1} parent=5 // pred_check_branch
      %2035 = sbr.rel (%p2033) target = $region92
    $region91: #{rgat_forward.1} parent=5 // pred_region
      %s2036 = ssub.s32 %s19, 2
    $region92: #{rgat_forward.1} parent=5 // pred_fallthru
      _
  $region6: #{rgat_forward.1} parent=0 // loop_footer
    %s23 = sadd.s32 1, %s19
  $region7: #{rgat_forward.1} parent=0 // loop_footer_branch
    %18 = sbr.rel target = $region3
  $region8: #{rgat_forward.1} parent=0 // loop_exit
    _

</llo_original>
